<compile_context>
chip_gen: v6e
topology: v6e:2x2x1
jax: 0.10.0
libtpu: 0.0.40
codegen_flags: <defaults>
</compile_context>

<pallas_src>
import math

import jax
import jax.numpy as jnp
import numpy as np
from jax.experimental import pallas as pl
from jax.experimental.pallas import tpu as pltpu


# --------------------------------------------------------------------------- #
# Kernel
# --------------------------------------------------------------------------- #
def gru122_kernel(x_ref, h_ref, wr_ref, br_ref, wz_ref, bz_ref,
                  win_ref, bin_ref, whn_ref, bhn_ref, out_ref):
    # Cast activations to bf16 only for the MXU; HBM traffic stays in the
    # caller's dtype and the z*dh passthrough below stays exact.
    xb = x_ref[...].astype(jnp.bfloat16)
    hb = h_ref[...].astype(jnp.bfloat16)

    # [x | h] fusion: xi_g + hh_g for g in {r, z} becomes a single matmul
    # with K = I + H (input/hidden biases pre-summed in fuse_params).
    xh = jnp.concatenate([xb, hb], axis=-1)

    r_pre = jnp.dot(xh, wr_ref[...], preferred_element_type=jnp.float32) + br_ref[...]
    z_pre = jnp.dot(xh, wz_ref[...], preferred_element_type=jnp.float32) + bz_ref[...]
    # The n gate keeps separate x / h terms because r gates only the h term.
    n_x = jnp.dot(xb, win_ref[...], preferred_element_type=jnp.float32) + bin_ref[...]
    n_h = jnp.dot(hb, whn_ref[...], preferred_element_type=jnp.float32) + bhn_ref[...]

    # sigmoid(a) = 0.5 * tanh(a / 2) + 0.5 : one EUP push per gate element.
    r = 0.5 * jnp.tanh(0.5 * r_pre) + 0.5
    z = 0.5 * jnp.tanh(0.5 * z_pre) + 0.5
    n = jnp.tanh(n_x + r * n_h)

    # Exact (un-rounded) h for the passthrough term.
    hf = h_ref[...].astype(jnp.float32)
    dh = jnp.concatenate([hf, hf], axis=-1)           # h.repeat(1, 1, 2)

    # (1 - z) * n + z * dh  ==  n + z * (dh - n); single lane-dense store.
    out_ref[...] = (n + z * (dh - n)).astype(out_ref.dtype)


# --------------------------------------------------------------------------- #
# Wrapper
# --------------------------------------------------------------------------- #
def _round_up(x, m):
    return (x + m - 1) // m * m


_VMEM_BUDGET = 40 * 1024 * 1024  # conservative: v7x has only 64 MiB physical VMEM


def _vmem_need_bytes(tm, I, H, out_bytes):
    """Rough pipeline VMEM footprint for one row tile of size tm."""
    H2 = 2 * H
    io = 2 * tm * (4 * I + 4 * H + out_bytes * H2)        # double-buffered x/h/out tiles
    weights = 2 * (2 * 3 * (I + H) * H2 + 4 * 4 * H2)     # conservative: 2 weight buffers
    live = tm * (8 * 4 * H2 + 2 * (I + H))                # f32 gate slabs + bf16 [x|h]
    return io + weights + live


def fuse_params(params):
    """One-time weight packing (hoist out of the per-step path).

    r/z gates get an [x | h]-fused weight ((I+H, 2H), bf16) with the input and
    hidden biases pre-summed; the n gate keeps separate (I,2H)/(H,2H) weights.
    """
    bf, f32 = jnp.bfloat16, jnp.float32
    return {
        "w_r": jnp.concatenate([params["wir_w"], params["whr_w"]], axis=0).astype(bf),
        "b_r": (params["wir_b"] + params["whr_b"]).astype(f32),
        "w_z": jnp.concatenate([params["wiz_w"], params["whz_w"]], axis=0).astype(bf),
        "b_z": (params["wiz_b"] + params["whz_b"]).astype(f32),
        "w_in": params["win_w"].astype(bf),
        "b_in": params["win_b"].astype(f32),
        "w_hn": params["whn_w"].astype(bf),
        "b_hn": params["whn_b"].astype(f32),
    }


def gru122_forward(x, h, fused, hidden_size, *, tm=512, out_dtype=jnp.bfloat16):
    """x: (B, S, I), h: (B, S, H), fused = fuse_params(...) -> two (B, S, H)."""
    B, S, I = x.shape
    H = hidden_size
    assert h.shape == (B, S, H)
    M = B * S
    H2 = 2 * H
    out_bytes = np.dtype(out_dtype).itemsize

    # Row tile: large (amortizes the ~0.35 us/step grid overhead) but
    #   * capped so the grid has >= 2 steps (both v7x TensorCores get work),
    #   * shrunk until the pipeline footprint fits the VMEM budget.
    tm_eff = min(_round_up(tm, 8), _round_up(max(-(-M // 2), 8), 8))
    while tm_eff > 8 and _vmem_need_bytes(tm_eff, I, H, out_bytes) > _VMEM_BUDGET:
        tm_eff = max(8, _round_up(tm_eff // 2, 8))
    # TODO(synk): for very large H (weights alone exceed the budget, H >~ 1024)
    # add a second grid axis tiling the 2H gate columns instead of shrinking tm.
    M_pad = _round_up(M, tm_eff)

    x2 = x.reshape(M, I)
    h2 = h.reshape(M, H)
    if M_pad != M:
        x2 = jnp.pad(x2, ((0, M_pad - M), (0, 0)))
        h2 = jnp.pad(h2, ((0, M_pad - M), (0, 0)))

    need = _vmem_need_bytes(tm_eff, I, H, out_bytes)
    vmem_limit = int(min(max(2 * need, 32 * 1024 * 1024), 50 * 1024 * 1024))

    cost = pl.CostEstimate(
        flops=2 * M_pad * 3 * (I + H) * H2 + 10 * M_pad * H2,
        transcendentals=3 * M_pad * H2,
        bytes_accessed=(x2.size * x2.dtype.itemsize
                        + h2.size * h2.dtype.itemsize
                        + 3 * (I + H) * H2 * 2 + 4 * H2 * 4
                        + M_pad * H2 * out_bytes),
    )

    grid = (M_pad // tm_eff,)
    args = (x2, h2, fused["w_r"], fused["b_r"], fused["w_z"], fused["b_z"],
            fused["w_in"], fused["b_in"], fused["w_hn"], fused["b_hn"])

    def build(single_buffer_weights):
        if single_buffer_weights:
            def const_spec(shape):
                # Constant index_map -> resident operand; a single buffer
                # halves the weight VMEM footprint.
                return pl.BlockSpec(shape, lambda i: (0, 0),
                                    pipeline_mode=pl.Buffered(1))
        else:
            def const_spec(shape):
                return pl.BlockSpec(shape, lambda i: (0, 0))

        return pl.pallas_call(
            gru122_kernel,
            out_shape=jax.ShapeDtypeStruct((M_pad, H2), out_dtype),
            grid_spec=pltpu.PrefetchScalarGridSpec(
                num_scalar_prefetch=0,
                grid=grid,
                in_specs=[
                    pl.BlockSpec((tm_eff, I), lambda i: (i, 0)),   # x rows
                    pl.BlockSpec((tm_eff, H), lambda i: (i, 0)),   # h rows
                    const_spec((I + H, H2)),                       # W_r  (resident)
                    const_spec((1, H2)),                           # b_r
                    const_spec((I + H, H2)),                       # W_z
                    const_spec((1, H2)),                           # b_z
                    const_spec((I, H2)),                           # W_in
                    const_spec((1, H2)),                           # b_in
                    const_spec((H, H2)),                           # W_hn
                    const_spec((1, H2)),                           # b_hn
                ],
                out_specs=pl.BlockSpec((tm_eff, H2), lambda i: (i, 0)),
            ),
            compiler_params=pltpu.CompilerParams(
                dimension_semantics=("parallel",),
                vmem_limit_bytes=vmem_limit,
            ),
            cost_estimate=cost,
        )

    try:
        # Preferred: single-buffered resident weights.
        out = build(single_buffer_weights=True)(*args)
        jax.block_until_ready(out)
    except Exception:
        # Fallback for Pallas versions that reject Buffered(1) on resident
        # operands: default double buffering (same semantics, more VMEM).
        out = build(single_buffer_weights=False)(*args)

    out = out[:M].reshape(B, S, H2)
    return out[..., :H], out[..., H:]


# --------------------------------------------------------------------------- #
# Init + pure-JAX reference
# --------------------------------------------------------------------------- #
def init_params(key, input_size, hidden_size):
    """nn.Linear(in, 2H): weight xavier_uniform, bias U[-1/sqrt(in), 1/sqrt(in)].
    Weights stored transposed here: (in, 2H)."""
    H2 = 2 * hidden_size
    params = {}
    layers = [
        ("wir", input_size), ("whr", hidden_size),
        ("wiz", input_size), ("whz", hidden_size),
        ("win", input_size), ("whn", hidden_size),
    ]
    for name, fan_in in layers:
        key, kw, kb = jax.random.split(key, 3)
        bound_w = math.sqrt(6.0 / (fan_in + H2))          # xavier_uniform
        w = jax.random.uniform(kw, (fan_in, H2), jnp.float32, -bound_w, bound_w)
        bound_b = 1.0 / math.sqrt(fan_in)                 # nn.Linear default bias
        b = jax.random.uniform(kb, (1, H2), jnp.float32, -bound_b, bound_b)
        params[name + "_w"] = w
        params[name + "_b"] = b
    return params


def gru122_reference(x, h, params, hidden_size):
    """Pure-JAX f32 reference for verification."""
    def lin(inp, name):
        return inp @ params[name + "_w"] + params[name + "_b"]

    r = jax.nn.sigmoid(lin(x, "wir") + lin(h, "whr"))
    z = jax.nn.sigmoid(lin(x, "wiz") + lin(h, "whz"))
    n = jnp.tanh(lin(x, "win") + r * lin(h, "whn"))
    dh = jnp.concatenate([h, h], axis=-1)
    out = (1.0 - z) * n + z * dh
    return out[..., :hidden_size], out[..., hidden_size:]


# --------------------------------------------------------------------------- #
# Self-test
# --------------------------------------------------------------------------- #
if __name__ == "__main__":
    B, S = 2, 8
    input_size, hidden_size = 16, 32

    key = jax.random.PRNGKey(0)
    kx, kh, kp = jax.random.split(key, 3)
    x = jax.random.normal(kx, (B, S, input_size), jnp.float32)
    h = jax.random.normal(kh, (B, S, hidden_size), jnp.float32)
    params = init_params(kp, input_size, hidden_size)
    fused = fuse_params(params)      # one-time packing, outside the step path

    out1, out2 = gru122_forward(x, h, fused, hidden_size)
    jax.block_until_ready((out1, out2))

    ref1, ref2 = gru122_reference(x, h, params, hidden_size)
    assert out1.shape == (B, S, hidden_size) and out2.shape == (B, S, hidden_size)
    # bf16 matmul inputs / bf16 output -> relaxed tolerance vs. the f32 reference.
    assert jnp.allclose(out1.astype(jnp.float32), ref1, atol=2e-2, rtol=2e-2)
    assert jnp.allclose(out2.astype(jnp.float32), ref2, atol=2e-2, rtol=2e-2)

    print("KERNEL_OK")
</pallas_src>

<mosaic_0001>
module attributes {stable_mosaic.version = 11 : i64} {
  func.func @gru122_kernel(%arg0: i32, %arg1: memref<8x16xf32, #tpu.memory_space<vmem>>, %arg2: memref<8x32xf32, #tpu.memory_space<vmem>>, %arg3: memref<48x64xbf16, #tpu.memory_space<vmem>>, %arg4: memref<1x64xf32, #tpu.memory_space<vmem>>, %arg5: memref<48x64xbf16, #tpu.memory_space<vmem>>, %arg6: memref<1x64xf32, #tpu.memory_space<vmem>>, %arg7: memref<16x64xbf16, #tpu.memory_space<vmem>>, %arg8: memref<1x64xf32, #tpu.memory_space<vmem>>, %arg9: memref<32x64xbf16, #tpu.memory_space<vmem>>, %arg10: memref<1x64xf32, #tpu.memory_space<vmem>>, %arg11: memref<8x64xbf16, #tpu.memory_space<vmem>>) attributes {dimension_semantics = [#tpu.dimension_semantics<parallel>], iteration_bounds = array<i64: 2>, scalar_prefetch = 0 : i64, scratch_operands = 0 : i64, tpu.core_type = #tpu.core_type<tc>, window_params = [{transform_indices = @transform_0, window_bounds = array<i64: 8, 16>}, {transform_indices = @transform_1, window_bounds = array<i64: 8, 32>}, {pipeline_mode = #tpu.pipeline_mode<synchronous>, transform_indices = @transform_2, window_bounds = array<i64: 48, 64>}, {pipeline_mode = #tpu.pipeline_mode<synchronous>, transform_indices = @transform_3, window_bounds = array<i64: 1, 64>}, {pipeline_mode = #tpu.pipeline_mode<synchronous>, transform_indices = @transform_4, window_bounds = array<i64: 48, 64>}, {pipeline_mode = #tpu.pipeline_mode<synchronous>, transform_indices = @transform_5, window_bounds = array<i64: 1, 64>}, {pipeline_mode = #tpu.pipeline_mode<synchronous>, transform_indices = @transform_6, window_bounds = array<i64: 16, 64>}, {pipeline_mode = #tpu.pipeline_mode<synchronous>, transform_indices = @transform_7, window_bounds = array<i64: 1, 64>}, {pipeline_mode = #tpu.pipeline_mode<synchronous>, transform_indices = @transform_8, window_bounds = array<i64: 32, 64>}, {pipeline_mode = #tpu.pipeline_mode<synchronous>, transform_indices = @transform_9, window_bounds = array<i64: 1, 64>}, {transform_indices = @transform_10, window_bounds = array<i64: 8, 64>}]} {
    %c0 = arith.constant 0 : index
    %c0_0 = arith.constant 0 : index
    %0 = vector.load %arg1[%c0, %c0_0] : memref<8x16xf32, #tpu.memory_space<vmem>>, vector<8x16xf32>
    %1 = arith.truncf %0 : vector<8x16xf32> to vector<8x16xbf16>
    %c0_1 = arith.constant 0 : index
    %c0_2 = arith.constant 0 : index
    %2 = vector.load %arg2[%c0_1, %c0_2] : memref<8x32xf32, #tpu.memory_space<vmem>>, vector<8x32xf32>
    %3 = arith.truncf %2 : vector<8x32xf32> to vector<8x32xbf16>
    %4 = tpu.concatenate %1, %3 in 1 : vector<8x16xbf16>, vector<8x32xbf16> -> vector<8x48xbf16>
    %c0_3 = arith.constant 0 : index
    %c0_4 = arith.constant 0 : index
    %5 = vector.load %arg3[%c0_3, %c0_4] : memref<48x64xbf16, #tpu.memory_space<vmem>>, vector<48x64xbf16>
    %cst = arith.constant dense<0.000000e+00> : vector<8x64xf32>
    %6 = tpu.matmul %4, %5, %cst {dimension_numbers = #tpu.dot_dimension_numbers<[1], [0], [0], [1], [0, 0, 1, 1], [], []>} : vector<8x48xbf16>, vector<48x64xbf16>, vector<8x64xf32> -> vector<8x64xf32>
    %c0_5 = arith.constant 0 : index
    %c0_6 = arith.constant 0 : index
    %7 = vector.load %arg4[%c0_5, %c0_6] : memref<1x64xf32, #tpu.memory_space<vmem>>, vector<1x64xf32>
    %8 = vector.broadcast %7 : vector<1x64xf32> to vector<8x64xf32>
    %9 = arith.addf %6, %8 : vector<8x64xf32>
    %c0_7 = arith.constant 0 : index
    %c0_8 = arith.constant 0 : index
    %10 = vector.load %arg5[%c0_7, %c0_8] : memref<48x64xbf16, #tpu.memory_space<vmem>>, vector<48x64xbf16>
    %cst_9 = arith.constant dense<0.000000e+00> : vector<8x64xf32>
    %11 = tpu.matmul %4, %10, %cst_9 {dimension_numbers = #tpu.dot_dimension_numbers<[1], [0], [0], [1], [0, 0, 1, 1], [], []>} : vector<8x48xbf16>, vector<48x64xbf16>, vector<8x64xf32> -> vector<8x64xf32>
    %c0_10 = arith.constant 0 : index
    %c0_11 = arith.constant 0 : index
    %12 = vector.load %arg6[%c0_10, %c0_11] : memref<1x64xf32, #tpu.memory_space<vmem>>, vector<1x64xf32>
    %13 = vector.broadcast %12 : vector<1x64xf32> to vector<8x64xf32>
    %14 = arith.addf %11, %13 : vector<8x64xf32>
    %c0_12 = arith.constant 0 : index
    %c0_13 = arith.constant 0 : index
    %15 = vector.load %arg7[%c0_12, %c0_13] : memref<16x64xbf16, #tpu.memory_space<vmem>>, vector<16x64xbf16>
    %cst_14 = arith.constant dense<0.000000e+00> : vector<8x64xf32>
    %16 = tpu.matmul %1, %15, %cst_14 {dimension_numbers = #tpu.dot_dimension_numbers<[1], [0], [0], [1], [0, 0, 1, 1], [], []>} : vector<8x16xbf16>, vector<16x64xbf16>, vector<8x64xf32> -> vector<8x64xf32>
    %c0_15 = arith.constant 0 : index
    %c0_16 = arith.constant 0 : index
    %17 = vector.load %arg8[%c0_15, %c0_16] : memref<1x64xf32, #tpu.memory_space<vmem>>, vector<1x64xf32>
    %18 = vector.broadcast %17 : vector<1x64xf32> to vector<8x64xf32>
    %19 = arith.addf %16, %18 : vector<8x64xf32>
    %c0_17 = arith.constant 0 : index
    %c0_18 = arith.constant 0 : index
    %20 = vector.load %arg9[%c0_17, %c0_18] : memref<32x64xbf16, #tpu.memory_space<vmem>>, vector<32x64xbf16>
    %cst_19 = arith.constant dense<0.000000e+00> : vector<8x64xf32>
    %21 = tpu.matmul %3, %20, %cst_19 {dimension_numbers = #tpu.dot_dimension_numbers<[1], [0], [0], [1], [0, 0, 1, 1], [], []>} : vector<8x32xbf16>, vector<32x64xbf16>, vector<8x64xf32> -> vector<8x64xf32>
    %c0_20 = arith.constant 0 : index
    %c0_21 = arith.constant 0 : index
    %22 = vector.load %arg10[%c0_20, %c0_21] : memref<1x64xf32, #tpu.memory_space<vmem>>, vector<1x64xf32>
    %23 = vector.broadcast %22 : vector<1x64xf32> to vector<8x64xf32>
    %24 = arith.addf %21, %23 : vector<8x64xf32>
    %cst_22 = arith.constant 5.000000e-01 : f32
    %25 = vector.broadcast %cst_22 : f32 to vector<8x64xf32>
    %26 = arith.mulf %25, %9 : vector<8x64xf32>
    %27 = math.tanh %26 : vector<8x64xf32>
    %cst_23 = arith.constant 5.000000e-01 : f32
    %28 = vector.broadcast %cst_23 : f32 to vector<8x64xf32>
    %29 = arith.mulf %28, %27 : vector<8x64xf32>
    %cst_24 = arith.constant 5.000000e-01 : f32
    %30 = vector.broadcast %cst_24 : f32 to vector<8x64xf32>
    %31 = arith.addf %29, %30 : vector<8x64xf32>
    %cst_25 = arith.constant 5.000000e-01 : f32
    %32 = vector.broadcast %cst_25 : f32 to vector<8x64xf32>
    %33 = arith.mulf %32, %14 : vector<8x64xf32>
    %34 = math.tanh %33 : vector<8x64xf32>
    %cst_26 = arith.constant 5.000000e-01 : f32
    %35 = vector.broadcast %cst_26 : f32 to vector<8x64xf32>
    %36 = arith.mulf %35, %34 : vector<8x64xf32>
    %cst_27 = arith.constant 5.000000e-01 : f32
    %37 = vector.broadcast %cst_27 : f32 to vector<8x64xf32>
    %38 = arith.addf %36, %37 : vector<8x64xf32>
    %39 = arith.mulf %31, %24 : vector<8x64xf32>
    %40 = arith.addf %19, %39 : vector<8x64xf32>
    %41 = math.tanh %40 : vector<8x64xf32>
    %c0_28 = arith.constant 0 : index
    %c0_29 = arith.constant 0 : index
    %42 = vector.load %arg2[%c0_28, %c0_29] : memref<8x32xf32, #tpu.memory_space<vmem>>, vector<8x32xf32>
    %43 = tpu.concatenate %42, %42 in 1 : vector<8x32xf32>, vector<8x32xf32> -> vector<8x64xf32>
    %44 = arith.subf %43, %41 : vector<8x64xf32>
    %45 = arith.mulf %38, %44 : vector<8x64xf32>
    %46 = arith.addf %41, %45 : vector<8x64xf32>
    %47 = arith.truncf %46 : vector<8x64xf32> to vector<8x64xbf16>
    %c0_30 = arith.constant 0 : index
    %c0_31 = arith.constant 0 : index
    %48 = vector.load %arg11[%c0_30, %c0_31] : memref<8x64xbf16, #tpu.memory_space<vmem>>, vector<8x64xbf16>
    tpu.vector_store %arg11[%c0_30, %c0_31], %47 {strides = array<i32>} : memref<8x64xbf16, #tpu.memory_space<vmem>>, vector<8x64xbf16>,
    return
  }
  func.func @transform_0(%arg0: i32) -> (i32, i32) {
    %c0_i32 = arith.constant 0 : i32
    %c0_i32_0 = arith.constant 0 : i32
    return %arg0, %c0_i32 : i32, i32
  }
  func.func @transform_1(%arg0: i32) -> (i32, i32) {
    %c0_i32 = arith.constant 0 : i32
    %c0_i32_0 = arith.constant 0 : i32
    return %arg0, %c0_i32 : i32, i32
  }
  func.func @transform_2(%arg0: i32) -> (i32, i32) {
    %c0_i32 = arith.constant 0 : i32
    %c0_i32_0 = arith.constant 0 : i32
    %c0_i32_1 = arith.constant 0 : i32
    return %c0_i32, %c0_i32_0 : i32, i32
  }
  func.func @transform_3(%arg0: i32) -> (i32, i32) {
    %c0_i32 = arith.constant 0 : i32
    %c0_i32_0 = arith.constant 0 : i32
    %c0_i32_1 = arith.constant 0 : i32
    return %c0_i32, %c0_i32_0 : i32, i32
  }
  func.func @transform_4(%arg0: i32) -> (i32, i32) {
    %c0_i32 = arith.constant 0 : i32
    %c0_i32_0 = arith.constant 0 : i32
    %c0_i32_1 = arith.constant 0 : i32
    return %c0_i32, %c0_i32_0 : i32, i32
  }
  func.func @transform_5(%arg0: i32) -> (i32, i32) {
    %c0_i32 = arith.constant 0 : i32
    %c0_i32_0 = arith.constant 0 : i32
    %c0_i32_1 = arith.constant 0 : i32
    return %c0_i32, %c0_i32_0 : i32, i32
  }
  func.func @transform_6(%arg0: i32) -> (i32, i32) {
    %c0_i32 = arith.constant 0 : i32
    %c0_i32_0 = arith.constant 0 : i32
    %c0_i32_1 = arith.constant 0 : i32
    return %c0_i32, %c0_i32_0 : i32, i32
  }
  func.func @transform_7(%arg0: i32) -> (i32, i32) {
    %c0_i32 = arith.constant 0 : i32
    %c0_i32_0 = arith.constant 0 : i32
    %c0_i32_1 = arith.constant 0 : i32
    return %c0_i32, %c0_i32_0 : i32, i32
  }
  func.func @transform_8(%arg0: i32) -> (i32, i32) {
    %c0_i32 = arith.constant 0 : i32
    %c0_i32_0 = arith.constant 0 : i32
    %c0_i32_1 = arith.constant 0 : i32
    return %c0_i32, %c0_i32_0 : i32, i32
  }
  func.func @transform_9(%arg0: i32) -> (i32, i32) {
    %c0_i32 = arith.constant 0 : i32
    %c0_i32_0 = arith.constant 0 : i32
    %c0_i32_1 = arith.constant 0 : i32
    return %c0_i32, %c0_i32_0 : i32, i32
  }
  func.func @transform_10(%arg0: i32) -> (i32, i32) {
    %c0_i32 = arith.constant 0 : i32
    %c0_i32_0 = arith.constant 0 : i32
    return %arg0, %c0_i32 : i32, i32
  }
}

module attributes {stable_mosaic.version = 11 : i64} {
  func.func @gru122_kernel(%arg0: i32, %arg1: memref<8x16xf32, #tpu.memory_space<vmem>>, %arg2: memref<8x32xf32, #tpu.memory_space<vmem>>, %arg3: memref<48x64xbf16, #tpu.memory_space<vmem>>, %arg4: memref<1x64xf32, #tpu.memory_space<vmem>>, %arg5: memref<48x64xbf16, #tpu.memory_space<vmem>>, %arg6: memref<1x64xf32, #tpu.memory_space<vmem>>, %arg7: memref<16x64xbf16, #tpu.memory_space<vmem>>, %arg8: memref<1x64xf32, #tpu.memory_space<vmem>>, %arg9: memref<32x64xbf16, #tpu.memory_space<vmem>>, %arg10: memref<1x64xf32, #tpu.memory_space<vmem>>, %arg11: memref<8x64xbf16, #tpu.memory_space<vmem>>) attributes {dimension_semantics = [#tpu.dimension_semantics<parallel>], iteration_bounds = array<i64: 2>, scalar_prefetch = 0 : i64, scratch_operands = 0 : i64, tpu.core_type = #tpu.core_type<tc>, window_params = [{transform_indices = @transform_0, window_bounds = array<i64: 8, 16>}, {transform_indices = @transform_1, window_bounds = array<i64: 8, 32>}, {pipeline_mode = #tpu.pipeline_mode<synchronous>, transform_indices = @transform_2, window_bounds = array<i64: 48, 64>}, {pipeline_mode = #tpu.pipeline_mode<synchronous>, transform_indices = @transform_3, window_bounds = array<i64: 1, 64>}, {pipeline_mode = #tpu.pipeline_mode<synchronous>, transform_indices = @transform_4, window_bounds = array<i64: 48, 64>}, {pipeline_mode = #tpu.pipeline_mode<synchronous>, transform_indices = @transform_5, window_bounds = array<i64: 1, 64>}, {pipeline_mode = #tpu.pipeline_mode<synchronous>, transform_indices = @transform_6, window_bounds = array<i64: 16, 64>}, {pipeline_mode = #tpu.pipeline_mode<synchronous>, transform_indices = @transform_7, window_bounds = array<i64: 1, 64>}, {pipeline_mode = #tpu.pipeline_mode<synchronous>, transform_indices = @transform_8, window_bounds = array<i64: 32, 64>}, {pipeline_mode = #tpu.pipeline_mode<synchronous>, transform_indices = @transform_9, window_bounds = array<i64: 1, 64>}, {transform_indices = @transform_10, window_bounds = array<i64: 8, 64>}]} {
    %c0 = arith.constant 0 : index
    %c0_0 = arith.constant 0 : index
    %0 = vector.load %arg1[%c0, %c0_0] : memref<8x16xf32, #tpu.memory_space<vmem>>, vector<8x16xf32>
    %1 = arith.truncf %0 : vector<8x16xf32> to vector<8x16xbf16>
    %c0_1 = arith.constant 0 : index
    %c0_2 = arith.constant 0 : index
    %2 = vector.load %arg2[%c0_1, %c0_2] : memref<8x32xf32, #tpu.memory_space<vmem>>, vector<8x32xf32>
    %3 = arith.truncf %2 : vector<8x32xf32> to vector<8x32xbf16>
    %4 = tpu.concatenate %1, %3 in 1 : vector<8x16xbf16>, vector<8x32xbf16> -> vector<8x48xbf16>
    %c0_3 = arith.constant 0 : index
    %c0_4 = arith.constant 0 : index
    %5 = vector.load %arg3[%c0_3, %c0_4] : memref<48x64xbf16, #tpu.memory_space<vmem>>, vector<48x64xbf16>
    %cst = arith.constant dense<0.000000e+00> : vector<8x64xf32>
    %6 = tpu.matmul %4, %5, %cst {dimension_numbers = #tpu.dot_dimension_numbers<[1], [0], [0], [1], [0, 0, 1, 1], [], []>} : vector<8x48xbf16>, vector<48x64xbf16>, vector<8x64xf32> -> vector<8x64xf32>
    %c0_5 = arith.constant 0 : index
    %c0_6 = arith.constant 0 : index
    %7 = vector.load %arg4[%c0_5, %c0_6] : memref<1x64xf32, #tpu.memory_space<vmem>>, vector<1x64xf32>
    %8 = vector.broadcast %7 : vector<1x64xf32> to vector<8x64xf32>
    %9 = arith.addf %6, %8 : vector<8x64xf32>
    %c0_7 = arith.constant 0 : index
    %c0_8 = arith.constant 0 : index
    %10 = vector.load %arg5[%c0_7, %c0_8] : memref<48x64xbf16, #tpu.memory_space<vmem>>, vector<48x64xbf16>
    %cst_9 = arith.constant dense<0.000000e+00> : vector<8x64xf32>
    %11 = tpu.matmul %4, %10, %cst_9 {dimension_numbers = #tpu.dot_dimension_numbers<[1], [0], [0], [1], [0, 0, 1, 1], [], []>} : vector<8x48xbf16>, vector<48x64xbf16>, vector<8x64xf32> -> vector<8x64xf32>
    %c0_10 = arith.constant 0 : index
    %c0_11 = arith.constant 0 : index
    %12 = vector.load %arg6[%c0_10, %c0_11] : memref<1x64xf32, #tpu.memory_space<vmem>>, vector<1x64xf32>
    %13 = vector.broadcast %12 : vector<1x64xf32> to vector<8x64xf32>
    %14 = arith.addf %11, %13 : vector<8x64xf32>
    %c0_12 = arith.constant 0 : index
    %c0_13 = arith.constant 0 : index
    %15 = vector.load %arg7[%c0_12, %c0_13] : memref<16x64xbf16, #tpu.memory_space<vmem>>, vector<16x64xbf16>
    %cst_14 = arith.constant dense<0.000000e+00> : vector<8x64xf32>
    %16 = tpu.matmul %1, %15, %cst_14 {dimension_numbers = #tpu.dot_dimension_numbers<[1], [0], [0], [1], [0, 0, 1, 1], [], []>} : vector<8x16xbf16>, vector<16x64xbf16>, vector<8x64xf32> -> vector<8x64xf32>
    %c0_15 = arith.constant 0 : index
    %c0_16 = arith.constant 0 : index
    %17 = vector.load %arg8[%c0_15, %c0_16] : memref<1x64xf32, #tpu.memory_space<vmem>>, vector<1x64xf32>
    %18 = vector.broadcast %17 : vector<1x64xf32> to vector<8x64xf32>
    %19 = arith.addf %16, %18 : vector<8x64xf32>
    %c0_17 = arith.constant 0 : index
    %c0_18 = arith.constant 0 : index
    %20 = vector.load %arg9[%c0_17, %c0_18] : memref<32x64xbf16, #tpu.memory_space<vmem>>, vector<32x64xbf16>
    %cst_19 = arith.constant dense<0.000000e+00> : vector<8x64xf32>
    %21 = tpu.matmul %3, %20, %cst_19 {dimension_numbers = #tpu.dot_dimension_numbers<[1], [0], [0], [1], [0, 0, 1, 1], [], []>} : vector<8x32xbf16>, vector<32x64xbf16>, vector<8x64xf32> -> vector<8x64xf32>
    %c0_20 = arith.constant 0 : index
    %c0_21 = arith.constant 0 : index
    %22 = vector.load %arg10[%c0_20, %c0_21] : memref<1x64xf32, #tpu.memory_space<vmem>>, vector<1x64xf32>
    %23 = vector.broadcast %22 : vector<1x64xf32> to vector<8x64xf32>
    %24 = arith.addf %21, %23 : vector<8x64xf32>
    %cst_22 = arith.constant 5.000000e-01 : f32
    %25 = vector.broadcast %cst_22 : f32 to vector<8x64xf32>
    %26 = arith.mulf %25, %9 : vector<8x64xf32>
    %27 = math.tanh %26 : vector<8x64xf32>
    %cst_23 = arith.constant 5.000000e-01 : f32
    %28 = vector.broadcast %cst_23 : f32 to vector<8x64xf32>
    %29 = arith.mulf %28, %27 : vector<8x64xf32>
    %cst_24 = arith.constant 5.000000e-01 : f32
    %30 = vector.broadcast %cst_24 : f32 to vector<8x64xf32>
    %31 = arith.addf %29, %30 : vector<8x64xf32>
    %cst_25 = arith.constant 5.000000e-01 : f32
    %32 = vector.broadcast %cst_25 : f32 to vector<8x64xf32>
    %33 = arith.mulf %32, %14 : vector<8x64xf32>
    %34 = math.tanh %33 : vector<8x64xf32>
    %cst_26 = arith.constant 5.000000e-01 : f32
    %35 = vector.broadcast %cst_26 : f32 to vector<8x64xf32>
    %36 = arith.mulf %35, %34 : vector<8x64xf32>
    %cst_27 = arith.constant 5.000000e-01 : f32
    %37 = vector.broadcast %cst_27 : f32 to vector<8x64xf32>
    %38 = arith.addf %36, %37 : vector<8x64xf32>
    %39 = arith.mulf %31, %24 : vector<8x64xf32>
    %40 = arith.addf %19, %39 : vector<8x64xf32>
    %41 = math.tanh %40 : vector<8x64xf32>
    %c0_28 = arith.constant 0 : index
    %c0_29 = arith.constant 0 : index
    %42 = vector.load %arg2[%c0_28, %c0_29] : memref<8x32xf32, #tpu.memory_space<vmem>>, vector<8x32xf32>
    %43 = tpu.concatenate %42, %42 in 1 : vector<8x32xf32>, vector<8x32xf32> -> vector<8x64xf32>
    %44 = arith.subf %43, %41 : vector<8x64xf32>
    %45 = arith.mulf %38, %44 : vector<8x64xf32>
    %46 = arith.addf %41, %45 : vector<8x64xf32>
    %47 = arith.truncf %46 : vector<8x64xf32> to vector<8x64xbf16>
    %c0_30 = arith.constant 0 : index
    %c0_31 = arith.constant 0 : index
    %48 = vector.load %arg11[%c0_30, %c0_31] : memref<8x64xbf16, #tpu.memory_space<vmem>>, vector<8x64xbf16>
    tpu.vector_store %arg11[%c0_30, %c0_31], %47 {strides = array<i32>} : memref<8x64xbf16, #tpu.memory_space<vmem>>, vector<8x64xbf16>,
    return
  }
  func.func @transform_0(%arg0: i32) -> (i32, i32) {
    %c0_i32 = arith.constant 0 : i32
    %c0_i32_0 = arith.constant 0 : i32
    return %arg0, %c0_i32 : i32, i32
  }
  func.func @transform_1(%arg0: i32) -> (i32, i32) {
    %c0_i32 = arith.constant 0 : i32
    %c0_i32_0 = arith.constant 0 : i32
    return %arg0, %c0_i32 : i32, i32
  }
  func.func @transform_2(%arg0: i32) -> (i32, i32) {
    %c0_i32 = arith.constant 0 : i32
    %c0_i32_0 = arith.constant 0 : i32
    %c0_i32_1 = arith.constant 0 : i32
    return %c0_i32, %c0_i32_0 : i32, i32
  }
  func.func @transform_3(%arg0: i32) -> (i32, i32) {
    %c0_i32 = arith.constant 0 : i32
    %c0_i32_0 = arith.constant 0 : i32
    %c0_i32_1 = arith.constant 0 : i32
    return %c0_i32, %c0_i32_0 : i32, i32
  }
  func.func @transform_4(%arg0: i32) -> (i32, i32) {
    %c0_i32 = arith.constant 0 : i32
    %c0_i32_0 = arith.constant 0 : i32
    %c0_i32_1 = arith.constant 0 : i32
    return %c0_i32, %c0_i32_0 : i32, i32
  }
  func.func @transform_5(%arg0: i32) -> (i32, i32) {
    %c0_i32 = arith.constant 0 : i32
    %c0_i32_0 = arith.constant 0 : i32
    %c0_i32_1 = arith.constant 0 : i32
    return %c0_i32, %c0_i32_0 : i32, i32
  }
  func.func @transform_6(%arg0: i32) -> (i32, i32) {
    %c0_i32 = arith.constant 0 : i32
    %c0_i32_0 = arith.constant 0 : i32
    %c0_i32_1 = arith.constant 0 : i32
    return %c0_i32, %c0_i32_0 : i32, i32
  }
  func.func @transform_7(%arg0: i32) -> (i32, i32) {
    %c0_i32 = arith.constant 0 : i32
    %c0_i32_0 = arith.constant 0 : i32
    %c0_i32_1 = arith.constant 0 : i32
    return %c0_i32, %c0_i32_0 : i32, i32
  }
  func.func @transform_8(%arg0: i32) -> (i32, i32) {
    %c0_i32 = arith.constant 0 : i32
    %c0_i32_0 = arith.constant 0 : i32
    %c0_i32_1 = arith.constant 0 : i32
    return %c0_i32, %c0_i32_0 : i32, i32
  }
  func.func @transform_9(%arg0: i32) -> (i32, i32) {
    %c0_i32 = arith.constant 0 : i32
    %c0_i32_0 = arith.constant 0 : i32
    %c0_i32_1 = arith.constant 0 : i32
    return %c0_i32, %c0_i32_0 : i32, i32
  }
  func.func @transform_10(%arg0: i32) -> (i32, i32) {
    %c0_i32 = arith.constant 0 : i32
    %c0_i32_0 = arith.constant 0 : i32
    return %arg0, %c0_i32 : i32, i32
  }
}

</mosaic_0001>

<llo_original>
// kernel: tpu_custom_call.1
$region0: #{tpu_custom_call.1}
  #allocation0 [shape = 'u32[]', space=smem, size = 0x4, offset = 0x4, fixed_abs, tag = 'smem constant byte address 0x4 - core index']
  #allocation1 [shape = 'u32[144,128]{1,0:T(1,128)}', space=vmem, size = 0x12000, scoped, tag = 'internal scratch']
  %s0 = inlined_call_operand.hbm [shape: f32[16,16], index: 0, kind: input, shape index: {}]
  %s1 = inlined_call_operand.hbm [shape: f32[16,32], index: 1, kind: input, shape index: {}]
  %s2 = inlined_call_operand.hbm [shape: bf16[48,64], index: 2, kind: input, shape index: {}]
  %s3 = inlined_call_operand.vmem [shape: f32[1,64], index: 3, kind: input, shape index: {}]
  %s4 = inlined_call_operand.hbm [shape: bf16[48,64], index: 4, kind: input, shape index: {}]
  %s5 = inlined_call_operand.vmem [shape: f32[1,64], index: 5, kind: input, shape index: {}]
  %s6 = inlined_call_operand.vmem [shape: bf16[16,64], index: 6, kind: input, shape index: {}]
  %s7 = inlined_call_operand.vmem [shape: f32[1,64], index: 7, kind: input, shape index: {}]
  %s8 = inlined_call_operand.hbm [shape: bf16[32,64], index: 8, kind: input, shape index: {}]
  %s9 = inlined_call_operand.vmem [shape: f32[1,64], index: 9, kind: input, shape index: {}]
  %s10 = inlined_call_operand.hbm [shape: bf16[16,64], index: 10, kind: output, shape index: {}]
  %s11 = sld [smem:[#allocation0]]
  $region93: #{tpu_custom_call.1} parent=0
    _
  %s13 = ssub.s32 1, %s11
  %s14 = scalar_select 0, %s13, %s11
  $region1: #{tpu_custom_call.1} parent=0
    #allocation2 [shape = 'u8[8192]{0}', space=vmem, size = 0x2000, scoped, tag = 'input window, operand 0']
    #allocation3 [shape = 's32[2]{0}', space=sflag, size = 0x8, scoped, tag = 'scoped memory for tpu_custom_call.1']
    #allocation4 [shape = 's32[2]{0}', space=sflag, size = 0x8, scoped, tag = 'scoped memory for tpu_custom_call.1']
    #allocation5 [shape = 'u8[8192]{0}', space=vmem, size = 0x2000, scoped, tag = 'input window, operand 1']
    #allocation6 [shape = 's32[2]{0}', space=sflag, size = 0x8, scoped, tag = 'scoped memory for tpu_custom_call.1']
    #allocation7 [shape = 'u8[12288]{0}', space=vmem, size = 0x3000, scoped, tag = 'input window, operand 2, single buffered']
    #allocation8 [shape = 'u8[12288]{0}', space=vmem, size = 0x3000, scoped, tag = 'input window, operand 4, single buffered']
    #allocation9 [shape = 's32[1]{0}', space=sflag, size = 0x4, scoped, tag = 'scoped memory for tpu_custom_call.1']
    #allocation10 [shape = 'u8[8192]{0}', space=vmem, size = 0x2000, scoped, tag = 'input window, operand 8, single buffered']
    #allocation11 [shape = 'u8[4096]{0}', space=vmem, size = 0x1000, scoped, tag = 'output window, operand 0']
    %15 = vsyncpa [#allocation3], 0
    %s16 = scalar_lea.sflag [#allocation3], 1
    %17 = vsyncpa %s16, 0
    %18 = vsyncpa [#allocation6], 0
    %s19 = scalar_lea.sflag [#allocation6], 1
    %20 = vsyncpa %s19, 0
    %21 = vsyncpa [#allocation9], 0
    %22 = vsyncpa [#allocation4], 0
    %s23 = scalar_lea.sflag [#allocation4], 1
    %24 = vsyncpa %s23, 0
    loop: start=0, step=1, limit=4
    $region2: #{tpu_custom_call.1} parent=1 // loop_pre_header
      _
    $region3: #{tpu_custom_call.1} parent=1 // loop_header
      %s26 = sphi 0, %s30
      %p27 = scmp.ge.s32.totalorder %s26, 4
      %s36 = sphi 0, %s38
      %s39 = sphi 0, %s36
      %s40 = sphi 0, %s39
      %s56 = sphi 0, %s40
      %s62 = sphi 0, %s64
      %s65 = sphi 0, %s62
      %s66 = sphi 0, %s65
      %s82 = sphi 0, %s66
      %s86 = sphi 0, %s86
      %s88 = sphi 0, %s86
      %s89 = sphi 0, %s88
      %s103 = sphi 0, %s89
      %s107 = sphi 0, %s107
      %s109 = sphi 0, %s107
      %s110 = sphi 0, %s109
      %s124 = sphi 0, %s110
      %s128 = sphi 0, %s128
      %s130 = sphi 0, %s128
      %s131 = sphi 0, %s130
      %s145 = sphi 0, %s131
      %s149 = sphi 0, %s149
      %s151 = sphi 0, %s149
      %s152 = sphi 0, %s151
      %s166 = sphi 0, %s152
      %s170 = sphi 0, %s170
      %s172 = sphi 0, %s170
      %s173 = sphi 0, %s172
      %s187 = sphi 0, %s173
      %s191 = sphi 0, %s191
      %s193 = sphi 0, %s191
      %s194 = sphi 0, %s193
      %s208 = sphi 0, %s194
      %s212 = sphi 0, %s212
      %s214 = sphi 0, %s212
      %s215 = sphi 0, %s214
      %s229 = sphi 0, %s215
      %s233 = sphi 0, %s233
      %s235 = sphi 0, %s233
      %s236 = sphi 0, %s235
      %s250 = sphi 0, %s236
      %s256 = sphi 0, %s258
      %s259 = sphi 0, %s256
      %s260 = sphi 0, %s259
      %s276 = sphi 0, %s260
    $region4: #{tpu_custom_call.1} parent=1 // loop_header_branch
      %29 = sbr.rel (%p27) target = $region8
    $region5: #{tpu_custom_call.1} parent=1 // loop_body
      %s31 = ssub.s32 %s26, 1
      %s32 = ssub.s32 %s26, 2
      %s33 = sadd.s32 %s26, 1
      %s34 = ssub.s32 %s26, %s33
      %p35 = scmp.eq.s32.totalorder %s34, 0
      %s37 = sadd.s32 %s36, 1
      %s38 = scalar_select %p35, %s36, %s37
      %p41 = pneg %p35
      %p42 = scmp.eq.s32.totalorder %s26, 1
      %p43 = por %p41, %p42
      %p44 = scmp.ne.s32.totalorder %s36, %s39
      %p45 = scmp.eq.s32.totalorder %s26, 0
      %p46 = por %p44, %p45
      %p47 = scmp.ne.s32.totalorder %s36, %s39
      %p48 = scmp.eq.s32.totalorder %s31, 1
      %p49 = por %p47, %p48
      %p50 = scmp.ne.s32.totalorder %s39, %s40
      %p51 = scmp.eq.s32.totalorder %s31, 0
      %p52 = por %p50, %p51
      %p53 = scmp.ne.s32.totalorder %s39, %s40
      %p54 = scmp.eq.s32.totalorder %s32, 1
      %p55 = por %p53, %p54
      %p57 = scmp.ne.s32.totalorder %s40, %s56
      %p58 = scmp.eq.s32.totalorder %s32, 0
      %p59 = por %p57, %p58
      %s60 = ssub.s32 %s26, %s33
      %p61 = scmp.eq.s32.totalorder %s60, 0
      %s63 = sadd.s32 %s62, 1
      %s64 = scalar_select %p61, %s62, %s63
      %p67 = pneg %p61
      %p68 = scmp.eq.s32.totalorder %s26, 1
      %p69 = por %p67, %p68
      %p70 = scmp.ne.s32.totalorder %s62, %s65
      %p71 = scmp.eq.s32.totalorder %s26, 0
      %p72 = por %p70, %p71
      %p73 = scmp.ne.s32.totalorder %s62, %s65
      %p74 = scmp.eq.s32.totalorder %s31, 1
      %p75 = por %p73, %p74
      %p76 = scmp.ne.s32.totalorder %s65, %s66
      %p77 = scmp.eq.s32.totalorder %s31, 0
      %p78 = por %p76, %p77
      %p79 = scmp.ne.s32.totalorder %s65, %s66
      %p80 = scmp.eq.s32.totalorder %s32, 1
      %p81 = por %p79, %p80
      %p83 = scmp.ne.s32.totalorder %s66, %s82
      %p84 = scmp.eq.s32.totalorder %s32, 0
      %p85 = por %p83, %p84
      %s87 = sadd.s32 %s86, 1
      %p90 = scmp.eq.s32.totalorder %s26, 1
      %p91 = scmp.ne.s32.totalorder %s86, %s88
      %p92 = scmp.eq.s32.totalorder %s26, 0
      %p93 = por %p91, %p92
      %p94 = scmp.ne.s32.totalorder %s86, %s88
      %p95 = scmp.eq.s32.totalorder %s31, 1
      %p96 = por %p94, %p95
      %p97 = scmp.ne.s32.totalorder %s88, %s89
      %p98 = scmp.eq.s32.totalorder %s31, 0
      %p99 = por %p97, %p98
      %p100 = scmp.ne.s32.totalorder %s88, %s89
      %p101 = scmp.eq.s32.totalorder %s32, 1
      %p102 = por %p100, %p101
      %p104 = scmp.ne.s32.totalorder %s89, %s103
      %p105 = scmp.eq.s32.totalorder %s32, 0
      %p106 = por %p104, %p105
      %s108 = sadd.s32 %s107, 1
      %p111 = scmp.eq.s32.totalorder %s26, 1
      %p112 = scmp.ne.s32.totalorder %s107, %s109
      %p113 = scmp.eq.s32.totalorder %s26, 0
      %p114 = por %p112, %p113
      %p115 = scmp.ne.s32.totalorder %s107, %s109
      %p116 = scmp.eq.s32.totalorder %s31, 1
      %p117 = por %p115, %p116
      %p118 = scmp.ne.s32.totalorder %s109, %s110
      %p119 = scmp.eq.s32.totalorder %s31, 0
      %p120 = por %p118, %p119
      %p121 = scmp.ne.s32.totalorder %s109, %s110
      %p122 = scmp.eq.s32.totalorder %s32, 1
      %p123 = por %p121, %p122
      %p125 = scmp.ne.s32.totalorder %s110, %s124
      %p126 = scmp.eq.s32.totalorder %s32, 0
      %p127 = por %p125, %p126
      %s129 = sadd.s32 %s128, 1
      %p132 = scmp.eq.s32.totalorder %s26, 1
      %p133 = scmp.ne.s32.totalorder %s128, %s130
      %p134 = scmp.eq.s32.totalorder %s26, 0
      %p135 = por %p133, %p134
      %p136 = scmp.ne.s32.totalorder %s128, %s130
      %p137 = scmp.eq.s32.totalorder %s31, 1
      %p138 = por %p136, %p137
      %p139 = scmp.ne.s32.totalorder %s130, %s131
      %p140 = scmp.eq.s32.totalorder %s31, 0
      %p141 = por %p139, %p140
      %p142 = scmp.ne.s32.totalorder %s130, %s131
      %p143 = scmp.eq.s32.totalorder %s32, 1
      %p144 = por %p142, %p143
      %p146 = scmp.ne.s32.totalorder %s131, %s145
      %p147 = scmp.eq.s32.totalorder %s32, 0
      %p148 = por %p146, %p147
      %s150 = sadd.s32 %s149, 1
      %p153 = scmp.eq.s32.totalorder %s26, 1
      %p154 = scmp.ne.s32.totalorder %s149, %s151
      %p155 = scmp.eq.s32.totalorder %s26, 0
      %p156 = por %p154, %p155
      %p157 = scmp.ne.s32.totalorder %s149, %s151
      %p158 = scmp.eq.s32.totalorder %s31, 1
      %p159 = por %p157, %p158
      %p160 = scmp.ne.s32.totalorder %s151, %s152
      %p161 = scmp.eq.s32.totalorder %s31, 0
      %p162 = por %p160, %p161
      %p163 = scmp.ne.s32.totalorder %s151, %s152
      %p164 = scmp.eq.s32.totalorder %s32, 1
      %p165 = por %p163, %p164
      %p167 = scmp.ne.s32.totalorder %s152, %s166
      %p168 = scmp.eq.s32.totalorder %s32, 0
      %p169 = por %p167, %p168
      %s171 = sadd.s32 %s170, 1
      %p174 = scmp.eq.s32.totalorder %s26, 1
      %p175 = scmp.ne.s32.totalorder %s170, %s172
      %p176 = scmp.eq.s32.totalorder %s26, 0
      %p177 = por %p175, %p176
      %p178 = scmp.ne.s32.totalorder %s170, %s172
      %p179 = scmp.eq.s32.totalorder %s31, 1
      %p180 = por %p178, %p179
      %p181 = scmp.ne.s32.totalorder %s172, %s173
      %p182 = scmp.eq.s32.totalorder %s31, 0
      %p183 = por %p181, %p182
      %p184 = scmp.ne.s32.totalorder %s172, %s173
      %p185 = scmp.eq.s32.totalorder %s32, 1
      %p186 = por %p184, %p185
      %p188 = scmp.ne.s32.totalorder %s173, %s187
      %p189 = scmp.eq.s32.totalorder %s32, 0
      %p190 = por %p188, %p189
      %s192 = sadd.s32 %s191, 1
      %p195 = scmp.eq.s32.totalorder %s26, 1
      %p196 = scmp.ne.s32.totalorder %s191, %s193
      %p197 = scmp.eq.s32.totalorder %s26, 0
      %p198 = por %p196, %p197
      %p199 = scmp.ne.s32.totalorder %s191, %s193
      %p200 = scmp.eq.s32.totalorder %s31, 1
      %p201 = por %p199, %p200
      %p202 = scmp.ne.s32.totalorder %s193, %s194
      %p203 = scmp.eq.s32.totalorder %s31, 0
      %p204 = por %p202, %p203
      %p205 = scmp.ne.s32.totalorder %s193, %s194
      %p206 = scmp.eq.s32.totalorder %s32, 1
      %p207 = por %p205, %p206
      %p209 = scmp.ne.s32.totalorder %s194, %s208
      %p210 = scmp.eq.s32.totalorder %s32, 0
      %p211 = por %p209, %p210
      %s213 = sadd.s32 %s212, 1
      %p216 = scmp.eq.s32.totalorder %s26, 1
      %p217 = scmp.ne.s32.totalorder %s212, %s214
      %p218 = scmp.eq.s32.totalorder %s26, 0
      %p219 = por %p217, %p218
      %p220 = scmp.ne.s32.totalorder %s212, %s214
      %p221 = scmp.eq.s32.totalorder %s31, 1
      %p222 = por %p220, %p221
      %p223 = scmp.ne.s32.totalorder %s214, %s215
      %p224 = scmp.eq.s32.totalorder %s31, 0
      %p225 = por %p223, %p224
      %p226 = scmp.ne.s32.totalorder %s214, %s215
      %p227 = scmp.eq.s32.totalorder %s32, 1
      %p228 = por %p226, %p227
      %p230 = scmp.ne.s32.totalorder %s215, %s229
      %p231 = scmp.eq.s32.totalorder %s32, 0
      %p232 = por %p230, %p231
      %s234 = sadd.s32 %s233, 1
      %p237 = scmp.eq.s32.totalorder %s26, 1
      %p238 = scmp.ne.s32.totalorder %s233, %s235
      %p239 = scmp.eq.s32.totalorder %s26, 0
      %p240 = por %p238, %p239
      %p241 = scmp.ne.s32.totalorder %s233, %s235
      %p242 = scmp.eq.s32.totalorder %s31, 1
      %p243 = por %p241, %p242
      %p244 = scmp.ne.s32.totalorder %s235, %s236
      %p245 = scmp.eq.s32.totalorder %s31, 0
      %p246 = por %p244, %p245
      %p247 = scmp.ne.s32.totalorder %s235, %s236
      %p248 = scmp.eq.s32.totalorder %s32, 1
      %p249 = por %p247, %p248
      %p251 = scmp.ne.s32.totalorder %s236, %s250
      %p252 = scmp.eq.s32.totalorder %s32, 0
      %p253 = por %p251, %p252
      %s254 = ssub.s32 %s26, %s33
      %p255 = scmp.eq.s32.totalorder %s254, 0
      %s257 = sadd.s32 %s256, 1
      %s258 = scalar_select %p255, %s256, %s257
      %p261 = pneg %p255
      %p262 = scmp.eq.s32.totalorder %s26, 1
      %p263 = por %p261, %p262
      %p264 = scmp.ne.s32.totalorder %s256, %s259
      %p265 = scmp.eq.s32.totalorder %s26, 0
      %p266 = por %p264, %p265
      %p267 = scmp.ne.s32.totalorder %s256, %s259
      %p268 = scmp.eq.s32.totalorder %s31, 1
      %p269 = por %p267, %p268
      %p270 = scmp.ne.s32.totalorder %s259, %s260
      %p271 = scmp.eq.s32.totalorder %s31, 0
      %p272 = por %p270, %p271
      %p273 = scmp.ne.s32.totalorder %s259, %s260
      %p274 = scmp.eq.s32.totalorder %s32, 1
      %p275 = por %p273, %p274
      %p277 = scmp.ne.s32.totalorder %s260, %s276
      %p278 = scmp.eq.s32.totalorder %s32, 0
      %p279 = por %p277, %p278
      %p280 = scmp.le.s32.totalorder 1, %s26
      %p281 = scmp.lt.s32.totalorder %s26, 3
      %p282 = pnand %p280, %p281
      %p283 = pneg %p282
      // Predicated region
      $region9: #{tpu_custom_call.1} parent=5 // pred_check
        _
      $region10: #{tpu_custom_call.1} parent=5 // pred_check_branch
        %285 = sbr.rel (%p282) target = $region12
      $region11: #{tpu_custom_call.1} parent=5 // pred_region
        %s286 = ssub.s32 %s26, 1
        // Predicated region
        $region13: #{tpu_custom_call.1} parent=11 // pred_check
          %p287 = pneg %p99
        $region14: #{tpu_custom_call.1} parent=11 // pred_check_branch
          %289 = sbr.rel (%p287) target = $region16
        $region15: #{tpu_custom_call.1} parent=11 // pred_region
          %s291 = ssub.s32 384, 384
          %292 = vsyncadd [#allocation6], %s291
          %s293 = sshll.u32 [#allocation7], 4
          %s294 = int_to_ptr.vmem [resolvable:$true] %s293
          %299 = dma.hbm_to_vmem [thread:$0]  %s2, 384, %s294, [#allocation6], 64, 64, 4
        $region16: #{tpu_custom_call.1} parent=11 // pred_fallthru
          _
        // Predicated region
        $region17: #{tpu_custom_call.1} parent=11 // pred_check
          %p300 = pneg %p120
        $region18: #{tpu_custom_call.1} parent=11 // pred_check_branch
          %302 = sbr.rel (%p300) target = $region20
        $region19: #{tpu_custom_call.1} parent=11 // pred_region
          _
        $region20: #{tpu_custom_call.1} parent=11 // pred_fallthru
          _
        // Predicated region
        $region21: #{tpu_custom_call.1} parent=11 // pred_check
          %p303 = pneg %p141
        $region22: #{tpu_custom_call.1} parent=11 // pred_check_branch
          %305 = sbr.rel (%p303) target = $region24
        $region23: #{tpu_custom_call.1} parent=11 // pred_region
          %s307 = ssub.s32 384, 384
          %308 = vsyncadd [#allocation9], %s307
          %s309 = sshll.u32 [#allocation8], 4
          %s310 = int_to_ptr.vmem [resolvable:$true] %s309
          %315 = dma.hbm_to_vmem [thread:$0]  %s4, 384, %s310, [#allocation9], 64, 64, 4
        $region24: #{tpu_custom_call.1} parent=11 // pred_fallthru
          _
        // Predicated region
        $region25: #{tpu_custom_call.1} parent=11 // pred_check
          %p316 = pneg %p162
        $region26: #{tpu_custom_call.1} parent=11 // pred_check_branch
          %318 = sbr.rel (%p316) target = $region28
        $region27: #{tpu_custom_call.1} parent=11 // pred_region
          _
        $region28: #{tpu_custom_call.1} parent=11 // pred_fallthru
          _
        // Predicated region
        $region29: #{tpu_custom_call.1} parent=11 // pred_check
          %p319 = pneg %p183
        $region30: #{tpu_custom_call.1} parent=11 // pred_check_branch
          %321 = sbr.rel (%p319) target = $region32
        $region31: #{tpu_custom_call.1} parent=11 // pred_region
          _
        $region32: #{tpu_custom_call.1} parent=11 // pred_fallthru
          _
        // Predicated region
        $region33: #{tpu_custom_call.1} parent=11 // pred_check
          %p322 = pneg %p204
        $region34: #{tpu_custom_call.1} parent=11 // pred_check_branch
          %324 = sbr.rel (%p322) target = $region36
        $region35: #{tpu_custom_call.1} parent=11 // pred_region
          _
        $region36: #{tpu_custom_call.1} parent=11 // pred_fallthru
          _
        // Predicated region
        $region37: #{tpu_custom_call.1} parent=11 // pred_check
          %p325 = pneg %p225
        $region38: #{tpu_custom_call.1} parent=11 // pred_check_branch
          %327 = sbr.rel (%p325) target = $region40
        $region39: #{tpu_custom_call.1} parent=11 // pred_region
          %s329 = ssub.s32 256, 256
          %330 = vsyncadd [#allocation9], %s329
          %s331 = sshll.u32 [#allocation10], 4
          %s332 = int_to_ptr.vmem [resolvable:$true] %s331
          %337 = dma.hbm_to_vmem [thread:$0]  %s8, 256, %s332, [#allocation9], 64, 64, 4
        $region40: #{tpu_custom_call.1} parent=11 // pred_fallthru
          _
        // Predicated region
        $region41: #{tpu_custom_call.1} parent=11 // pred_check
          %p338 = pneg %p246
        $region42: #{tpu_custom_call.1} parent=11 // pred_check_branch
          %340 = sbr.rel (%p338) target = $region44
        $region43: #{tpu_custom_call.1} parent=11 // pred_region
          _
        $region44: #{tpu_custom_call.1} parent=11 // pred_fallthru
          _
      $region12: #{tpu_custom_call.1} parent=5 // pred_fallthru
        _
      %p341 = scmp.lt.s32.totalorder %s26, 2
      // Predicated region
      $region45: #{tpu_custom_call.1} parent=5 // pred_check
        %p342 = pneg %p341
      $region46: #{tpu_custom_call.1} parent=5 // pred_check_branch
        %344 = sbr.rel (%p342) target = $region48
      $region47: #{tpu_custom_call.1} parent=5 // pred_region
        // Predicated region
        $region49: #{tpu_custom_call.1} parent=47 // pred_check
          %p345 = pneg %p46
        $region50: #{tpu_custom_call.1} parent=47 // pred_check_branch
          %347 = sbr.rel (%p345) target = $region52
        $region51: #{tpu_custom_call.1} parent=47 // pred_region
          %s348 = sand.u32 %s36, 1
          %s349 = scalar_lea.sflag [#allocation3], %s348
          %s350 = sand.u32 %s36, 1
          %s351 = smul.addr %s350, 8
          %s352 = scalar_lea.vmem [#allocation2], %s351
          %s354 = ssub.s32 128, 128
          %355 = vsyncadd %s349, %s354
          %s356 = smul.addr %s26, 128
          %s357 = scalar_lea.hbm %s0, %s356
          %s359 = sshll.u32 %s352, 4
          %s360 = int_to_ptr.vmem [resolvable:$true] %s359
          %362 = dma.hbm_to_vmem [thread:$0]  %s357, 128, %s360, %s349
        $region52: #{tpu_custom_call.1} parent=47 // pred_fallthru
          _
        // Predicated region
        $region53: #{tpu_custom_call.1} parent=47 // pred_check
          %p363 = pneg %p72
        $region54: #{tpu_custom_call.1} parent=47 // pred_check_branch
          %365 = sbr.rel (%p363) target = $region56
        $region55: #{tpu_custom_call.1} parent=47 // pred_region
          %s366 = sand.u32 %s26, 1
          %s367 = scalar_lea.sflag [#allocation6], %s366
          %s368 = sand.u32 %s62, 1
          %s369 = smul.addr %s368, 8
          %s370 = scalar_lea.vmem [#allocation5], %s369
          %s372 = ssub.s32 128, 128
          %373 = vsyncadd %s367, %s372
          %s374 = smul.addr %s26, 128
          %s375 = scalar_lea.hbm %s1, %s374
          %s377 = sshll.u32 %s370, 4
          %s378 = int_to_ptr.vmem [resolvable:$true] %s377
          %380 = dma.hbm_to_vmem [thread:$0]  %s375, 128, %s378, %s367
        $region56: #{tpu_custom_call.1} parent=47 // pred_fallthru
          _
      $region48: #{tpu_custom_call.1} parent=5 // pred_fallthru
        _
      %p381 = scmp.le.s32.totalorder 1, %s26
      %p382 = scmp.lt.s32.totalorder %s26, 3
      %p383 = pnand %p381, %p382
      %p384 = pneg %p383
      // Predicated region
      $region57: #{tpu_custom_call.1} parent=5 // pred_check
        _
      $region58: #{tpu_custom_call.1} parent=5 // pred_check_branch
        %386 = sbr.rel (%p383) target = $region60
      $region59: #{tpu_custom_call.1} parent=5 // pred_region
        %s387 = ssub.s32 %s26, 1
        %s388 = sand.u32 %s39, 1
        %s389 = scalar_lea.sflag [#allocation3], %s388
        %s390 = sand.u32 %s39, 1
        %s391 = smul.addr %s390, 8
        %s392 = scalar_lea.vmem [#allocation2], %s391
        // Predicated region
        $region61: #{tpu_custom_call.1} parent=59 // pred_check
          %p393 = pneg %p52
        $region62: #{tpu_custom_call.1} parent=59 // pred_check_branch
          %395 = sbr.rel (%p393) target = $region64
        $region63: #{tpu_custom_call.1} parent=59 // pred_region
          %396 = dma.done %s389, 128
        $region64: #{tpu_custom_call.1} parent=59 // pred_fallthru
          _
        %s397 = sand.u32 %s31, 1
        %s398 = scalar_lea.sflag [#allocation6], %s397
        %s399 = sand.u32 %s65, 1
        %s400 = smul.addr %s399, 8
        %s401 = scalar_lea.vmem [#allocation5], %s400
        // Predicated region
        $region65: #{tpu_custom_call.1} parent=59 // pred_check
          %p402 = pneg %p78
        $region66: #{tpu_custom_call.1} parent=59 // pred_check_branch
          %404 = sbr.rel (%p402) target = $region68
        $region67: #{tpu_custom_call.1} parent=59 // pred_region
          %405 = dma.done %s398, 128
        $region68: #{tpu_custom_call.1} parent=59 // pred_fallthru
          _
        // Predicated region
        $region69: #{tpu_custom_call.1} parent=59 // pred_check
          %p406 = pneg %p99
        $region70: #{tpu_custom_call.1} parent=59 // pred_check_branch
          %408 = sbr.rel (%p406) target = $region72
        $region71: #{tpu_custom_call.1} parent=59 // pred_region
          %409 = dma.done [#allocation6], 384
        $region72: #{tpu_custom_call.1} parent=59 // pred_fallthru
          _
        // Predicated region
        $region73: #{tpu_custom_call.1} parent=59 // pred_check
          %p410 = pneg %p141
        $region74: #{tpu_custom_call.1} parent=59 // pred_check_branch
          %412 = sbr.rel (%p410) target = $region76
        $region75: #{tpu_custom_call.1} parent=59 // pred_region
          %413 = dma.done [#allocation9], 384
        $region76: #{tpu_custom_call.1} parent=59 // pred_fallthru
          _
        // Predicated region
        $region77: #{tpu_custom_call.1} parent=59 // pred_check
          %p414 = pneg %p225
        $region78: #{tpu_custom_call.1} parent=59 // pred_check_branch
          %416 = sbr.rel (%p414) target = $region80
        $region79: #{tpu_custom_call.1} parent=59 // pred_region
          %417 = dma.done [#allocation9], 256
        $region80: #{tpu_custom_call.1} parent=59 // pred_fallthru
          _
        %s418 = sand.u32 %s39, 1
        %s419 = scalar_lea.sflag [#allocation3], %s418
        %s420 = sand.u32 %s39, 1
        %s421 = smul.addr %s420, 8
        %s422 = scalar_lea.vmem [#allocation2], %s421
        %p423 = pneg %p52
        %p424 = pneg %p49
        %s425 = sand.u32 %s31, 1
        %s426 = scalar_lea.sflag [#allocation6], %s425
        %s427 = sand.u32 %s65, 1
        %s428 = smul.addr %s427, 8
        %s429 = scalar_lea.vmem [#allocation5], %s428
        %p430 = pneg %p78
        %p431 = pneg %p75
        %p432 = pneg %p99
        %p433 = pneg %p96
        %p434 = pneg %p120
        %p435 = pneg %p117
        %p436 = pneg %p141
        %p437 = pneg %p138
        %p438 = pneg %p162
        %p439 = pneg %p159
        %p440 = pneg %p183
        %p441 = pneg %p180
        %p442 = pneg %p204
        %p443 = pneg %p201
        %p444 = pneg %p225
        %p445 = pneg %p222
        %p446 = pneg %p246
        %p447 = pneg %p243
        %p448 = pneg %p272
        %p449 = pneg %p269
        %s450 = sand.u32 %s259, 1
        %s451 = scalar_lea.sflag [#allocation4], %s450
        %s452 = sand.u32 %s259, 1
        %s453 = smul.addr %s452, 4
        %s454 = scalar_lea.vmem [#allocation11], %s453
        %v456 = vld [vmem:[%s392] sm:$0xff]
        %v457 = vpack.c.bf16 %v456, %v456
        %v458 = vld [vmem:[%s401] sm:$0xff]
        %v459 = vpack.c.bf16 %v458, %v458
        %461 = vrot.lane.b32.xlu0 %v459, 16
        %v462 = vpop.permute.xlu0 %461
        %vm463 = vcmask 130048
        %v466 = vsel %vm463, %v457, %v462
        %v467 = vld [vmem:[#allocation7] sm:$0xf]
        %v468 = vld [vmem:[#allocation7 + $0x4] sm:$0xf]
        %v469 = vld [vmem:[#allocation7 + $0x8] sm:$0xf]
        %v470 = vld [vmem:[#allocation7 + $0xc] sm:$0xf]
        %v471 = vld [vmem:[#allocation7 + $0x10] sm:$0xf]
        %v472 = vld [vmem:[#allocation7 + $0x14] sm:$0xf]
        %v473 = vld [vmem:[%s3] sm:$0x1]
        %v475 = vlaneseq
        %v476 = vshrl.u32 %v475, 7
        %v477 = vsub.s32 0, %v476
        %v478 = vrot.slane %v473, %v477
        %v486 = vunpack.c.l.b16 %v467
        %v487 = vunpack.c.l.b16 %v468
        %v488 = vunpack.c.l.b16 %v469
        %v489 = vunpack.c.l.b16 %v470
        %v490 = vunpack.c.l.b16 %v471
        %v491 = vunpack.c.l.b16 %v472
        %v492 = vpack.c.b16 %v487, %v486
        %v493 = vpack.c.b16 %v489, %v488
        %v494 = vpack.c.b16 %v491, %v490
        %vm498 = vcmask 392192
        %v499 = vsel %vm498, %v466, 0
        %501 = vmatprep.subr.bf16.mxu0 0
        %502 = vmatpush1.bf16.msra.mxu0 0
        %503 = vmatprep.subr.bf16.mxu0 0
        %504 = vmatpush1.bf16.msra.mxu0 0
        %505 = vmatprep.subr.bf16.mxu0 0
        %506 = vmatpush1.bf16.msra.mxu0 0
        %507 = vmatprep.subr.bf16.mxu0 0
        %508 = vmatpush1.bf16.msra.mxu0 0
        %509 = vmatprep.subr.bf16.mxu0 0
        %510 = vmatpush1.bf16.msra.mxu0 0
        %511 = vmatprep.subr.bf16.mxu0 0
        %512 = vmatpush1.bf16.msra.mxu0 %v494
        %513 = vmatprep.subr.bf16.mxu0 0
        %514 = vmatpush1.bf16.msra.mxu0 %v493
        %515 = vmatprep.subr.bf16.mxu0 0
        %516 = vmatpush1.bf16.msra.mxu0 %v492
        %517 = vmatprep.subr.bf16.mxu0 0
        %518 = vmatpush2.bf16.msra.mxu0 0
        %519 = vmatprep.subr.bf16.mxu0 0
        %520 = vmatpush2.bf16.msra.mxu0 0
        %521 = vmatprep.subr.bf16.mxu0 0
        %522 = vmatpush2.bf16.msra.mxu0 0
        %523 = vmatprep.subr.bf16.mxu0 0
        %524 = vmatpush2.bf16.msra.mxu0 0
        %525 = vmatprep.subr.bf16.mxu0 0
        %526 = vmatpush2.bf16.msra.mxu0 0
        %527 = vmatprep.subr.bf16.mxu0 0
        %528 = vmatpush2.bf16.msra.mxu0 0
        %529 = vmatprep.subr.bf16.mxu0 0
        %530 = vmatpush2.bf16.msra.mxu0 0
        %531 = vmatprep.subr.bf16.mxu0 0
        %532 = vmatpush2.bf16.msra.mxu0 0
        %533 = vmatprep.mubr.bf16.mxu0 0
        %534 = vmatmul.mubr.bf16.gmra.mxu0 %v499
        %v535 = vpop.f32.mrf.mxu0
        %v536 = vadd.f32 %v478, %v535
        %v537 = vpop.f32.mrf.mxu0
        %v538 = vpop.f32.mrf.mxu0
        %v539 = vpop.f32.mrf.mxu0
        %540 = vdwg.mxu0
        %v541 = vld [vmem:[#allocation8] sm:$0xf]
        %v542 = vld [vmem:[#allocation8 + $0x4] sm:$0xf]
        %v543 = vld [vmem:[#allocation8 + $0x8] sm:$0xf]
        %v544 = vld [vmem:[#allocation8 + $0xc] sm:$0xf]
        %v545 = vld [vmem:[#allocation8 + $0x10] sm:$0xf]
        %v546 = vld [vmem:[#allocation8 + $0x14] sm:$0xf]
        %v547 = vld [vmem:[%s5] sm:$0x1]
        %v549 = vlaneseq
        %v550 = vshrl.u32 %v549, 7
        %v551 = vsub.s32 0, %v550
        %v552 = vrot.slane %v547, %v551
        %v560 = vunpack.c.l.b16 %v541
        %v561 = vunpack.c.l.b16 %v542
        %v562 = vunpack.c.l.b16 %v543
        %v563 = vunpack.c.l.b16 %v544
        %v564 = vunpack.c.l.b16 %v545
        %v565 = vunpack.c.l.b16 %v546
        %v566 = vpack.c.b16 %v561, %v560
        %v567 = vpack.c.b16 %v563, %v562
        %v568 = vpack.c.b16 %v565, %v564
        %572 = vmatprep.subr.bf16.mxu0 0
        %573 = vmatpush1.bf16.msra.mxu0 0
        %574 = vmatprep.subr.bf16.mxu0 0
        %575 = vmatpush1.bf16.msra.mxu0 0
        %576 = vmatprep.subr.bf16.mxu0 0
        %577 = vmatpush1.bf16.msra.mxu0 0
        %578 = vmatprep.subr.bf16.mxu0 0
        %579 = vmatpush1.bf16.msra.mxu0 0
        %580 = vmatprep.subr.bf16.mxu0 0
        %581 = vmatpush1.bf16.msra.mxu0 0
        %582 = vmatprep.subr.bf16.mxu0 0
        %583 = vmatpush1.bf16.msra.mxu0 %v568
        %584 = vmatprep.subr.bf16.mxu0 0
        %585 = vmatpush1.bf16.msra.mxu0 %v567
        %586 = vmatprep.subr.bf16.mxu0 0
        %587 = vmatpush1.bf16.msra.mxu0 %v566
        %588 = vmatprep.subr.bf16.mxu0 0
        %589 = vmatpush2.bf16.msra.mxu0 0
        %590 = vmatprep.subr.bf16.mxu0 0
        %591 = vmatpush2.bf16.msra.mxu0 0
        %592 = vmatprep.subr.bf16.mxu0 0
        %593 = vmatpush2.bf16.msra.mxu0 0
        %594 = vmatprep.subr.bf16.mxu0 0
        %595 = vmatpush2.bf16.msra.mxu0 0
        %596 = vmatprep.subr.bf16.mxu0 0
        %597 = vmatpush2.bf16.msra.mxu0 0
        %598 = vmatprep.subr.bf16.mxu0 0
        %599 = vmatpush2.bf16.msra.mxu0 0
        %600 = vmatprep.subr.bf16.mxu0 0
        %601 = vmatpush2.bf16.msra.mxu0 0
        %602 = vmatprep.subr.bf16.mxu0 0
        %603 = vmatpush2.bf16.msra.mxu0 0
        %604 = vmatprep.mubr.bf16.mxu0 0
        %605 = vmatmul.mubr.bf16.gmra.mxu0 %v499
        %v606 = vpop.f32.mrf.mxu0
        %v607 = vadd.f32 %v552, %v606
        %v608 = vpop.f32.mrf.mxu0
        %v609 = vpop.f32.mrf.mxu0
        %v610 = vpop.f32.mrf.mxu0
        %611 = vdwg.mxu0
        %v612 = vld [vmem:[%s6] sm:$0xf]
        %v613 = vld [vmem:[%s6 + $0x4] sm:$0xf]
        %v614 = vld [vmem:[%s7] sm:$0x1]
        %v616 = vlaneseq
        %v617 = vshrl.u32 %v616, 7
        %v618 = vsub.s32 0, %v617
        %v619 = vrot.slane %v614, %v618
        %v623 = vunpack.c.l.b16 %v612
        %v624 = vunpack.c.l.b16 %v613
        %v625 = vpack.c.b16 %v624, %v623
        %v627 = vsel %vm463, %v457, 0
        %629 = vmatprep.subr.bf16.mxu0 0
        %630 = vmatpush1.bf16.msra.mxu0 0
        %631 = vmatprep.subr.bf16.mxu0 0
        %632 = vmatpush1.bf16.msra.mxu0 0
        %633 = vmatprep.subr.bf16.mxu0 0
        %634 = vmatpush1.bf16.msra.mxu0 0
        %635 = vmatprep.subr.bf16.mxu0 0
        %636 = vmatpush1.bf16.msra.mxu0 0
        %637 = vmatprep.subr.bf16.mxu0 0
        %638 = vmatpush1.bf16.msra.mxu0 0
        %639 = vmatprep.subr.bf16.mxu0 0
        %640 = vmatpush1.bf16.msra.mxu0 0
        %641 = vmatprep.subr.bf16.mxu0 0
        %642 = vmatpush1.bf16.msra.mxu0 0
        %643 = vmatprep.subr.bf16.mxu0 0
        %644 = vmatpush1.bf16.msra.mxu0 %v625
        %645 = vmatprep.subr.bf16.mxu0 0
        %646 = vmatpush2.bf16.msra.mxu0 0
        %647 = vmatprep.subr.bf16.mxu0 0
        %648 = vmatpush2.bf16.msra.mxu0 0
        %649 = vmatprep.subr.bf16.mxu0 0
        %650 = vmatpush2.bf16.msra.mxu0 0
        %651 = vmatprep.subr.bf16.mxu0 0
        %652 = vmatpush2.bf16.msra.mxu0 0
        %653 = vmatprep.subr.bf16.mxu0 0
        %654 = vmatpush2.bf16.msra.mxu0 0
        %655 = vmatprep.subr.bf16.mxu0 0
        %656 = vmatpush2.bf16.msra.mxu0 0
        %657 = vmatprep.subr.bf16.mxu0 0
        %658 = vmatpush2.bf16.msra.mxu0 0
        %659 = vmatprep.subr.bf16.mxu0 0
        %660 = vmatpush2.bf16.msra.mxu0 0
        %661 = vmatprep.mubr.bf16.mxu0 0
        %662 = vmatmul.mubr.bf16.gmra.mxu0 %v627
        %v663 = vpop.f32.mrf.mxu0
        %v664 = vadd.f32 %v619, %v663
        %v665 = vpop.f32.mrf.mxu0
        %v666 = vpop.f32.mrf.mxu0
        %v667 = vpop.f32.mrf.mxu0
        %668 = vdwg.mxu0
        %v669 = vld [vmem:[#allocation10] sm:$0xf]
        %v670 = vld [vmem:[#allocation10 + $0x4] sm:$0xf]
        %v671 = vld [vmem:[#allocation10 + $0x8] sm:$0xf]
        %v672 = vld [vmem:[#allocation10 + $0xc] sm:$0xf]
        %v673 = vld [vmem:[%s9] sm:$0x1]
        %v675 = vlaneseq
        %v676 = vshrl.u32 %v675, 7
        %v677 = vsub.s32 0, %v676
        %v678 = vrot.slane %v673, %v677
        %v684 = vunpack.c.l.b16 %v669
        %v685 = vunpack.c.l.b16 %v670
        %v686 = vunpack.c.l.b16 %v671
        %v687 = vunpack.c.l.b16 %v672
        %v688 = vpack.c.b16 %v685, %v684
        %v689 = vpack.c.b16 %v687, %v686
        %vm692 = vcmask 261120
        %v694 = vsel %vm692, %v459, 0
        %696 = vmatprep.subr.bf16.mxu0 0
        %697 = vmatpush1.bf16.msra.mxu0 0
        %698 = vmatprep.subr.bf16.mxu0 0
        %699 = vmatpush1.bf16.msra.mxu0 0
        %700 = vmatprep.subr.bf16.mxu0 0
        %701 = vmatpush1.bf16.msra.mxu0 0
        %702 = vmatprep.subr.bf16.mxu0 0
        %703 = vmatpush1.bf16.msra.mxu0 0
        %704 = vmatprep.subr.bf16.mxu0 0
        %705 = vmatpush1.bf16.msra.mxu0 0
        %706 = vmatprep.subr.bf16.mxu0 0
        %707 = vmatpush1.bf16.msra.mxu0 0
        %708 = vmatprep.subr.bf16.mxu0 0
        %709 = vmatpush1.bf16.msra.mxu0 %v689
        %710 = vmatprep.subr.bf16.mxu0 0
        %711 = vmatpush1.bf16.msra.mxu0 %v688
        %712 = vmatprep.subr.bf16.mxu0 0
        %713 = vmatpush2.bf16.msra.mxu0 0
        %714 = vmatprep.subr.bf16.mxu0 0
        %715 = vmatpush2.bf16.msra.mxu0 0
        %716 = vmatprep.subr.bf16.mxu0 0
        %717 = vmatpush2.bf16.msra.mxu0 0
        %718 = vmatprep.subr.bf16.mxu0 0
        %719 = vmatpush2.bf16.msra.mxu0 0
        %720 = vmatprep.subr.bf16.mxu0 0
        %721 = vmatpush2.bf16.msra.mxu0 0
        %722 = vmatprep.subr.bf16.mxu0 0
        %723 = vmatpush2.bf16.msra.mxu0 0
        %724 = vmatprep.subr.bf16.mxu0 0
        %725 = vmatpush2.bf16.msra.mxu0 0
        %726 = vmatprep.subr.bf16.mxu0 0
        %727 = vmatpush2.bf16.msra.mxu0 0
        %728 = vmatprep.mubr.bf16.mxu0 0
        %729 = vmatmul.mubr.bf16.gmra.mxu0 %v694
        %v730 = vpop.f32.mrf.mxu0
        %v731 = vadd.f32 %v678, %v730
        %v732 = vpop.f32.mrf.mxu0
        %v733 = vpop.f32.mrf.mxu0
        %v734 = vpop.f32.mrf.mxu0
        %735 = vdwg.mxu0
        %v736 = vmul.f32 %v536, 0.5
        %v737 = vtanh.pop %v736
        %v738 = vmul.f32 %v737, 0.5
        %v739 = vadd.f32 %v738, 0.5
        %v740 = vmul.f32 %v607, 0.5
        %v741 = vtanh.pop %v740
        %v742 = vmul.f32 %v741, 0.5
        %v743 = vadd.f32 %v742, 0.5
        %v744 = vmul.f32 %v739, %v731
        %v745 = vadd.f32 %v664, %v744
        %v746 = vtanh.pop %v745
        %748 = vrot.lane.b32.xlu0 %v458, 32
        %v749 = vpop.permute.xlu0 %748
        %v751 = vsel %vm692, %v458, %v749
        %v752 = vsub.f32 %v751, %v746
        %v753 = vmul.f32 %v743, %v752
        %v754 = vadd.f32 %v746, %v753
        %v755 = vpack.c.bf16 %v754, %v754
        %vm756 = vcmask 519168
        %757 = vst.msk [vmem:[%s454] sm:$0xf] %vm756, %v755
        %s758 = sand.u32 %s259, 1
        %s759 = scalar_lea.sflag [#allocation4], %s758
        %s760 = sand.u32 %s259, 1
        %s761 = smul.addr %s760, 4
        %s762 = scalar_lea.vmem [#allocation11], %s761
        // Predicated region
        $region81: #{tpu_custom_call.1} parent=59 // pred_check
          %p763 = pneg %p269
        $region82: #{tpu_custom_call.1} parent=59 // pred_check_branch
          %765 = sbr.rel (%p763) target = $region84
        $region83: #{tpu_custom_call.1} parent=59 // pred_region
          %s767 = ssub.s32 64, 64
          %768 = vsyncadd %s759, %s767
          %s769 = smul.addr %s31, 64
          %s770 = scalar_lea.hbm %s10, %s769
          %s772 = sshll.u32 %s762, 4
          %s773 = int_to_ptr.vmem [resolvable:$true] %s772
          %775 = dma.vmem_to_hbm [thread:$0]  %s773, 64, %s770, %s759
        $region84: #{tpu_custom_call.1} parent=59 // pred_fallthru
          _
      $region60: #{tpu_custom_call.1} parent=5 // pred_fallthru
        _
      %p776 = scmp.le.s32.totalorder 2, %s26
      // Predicated region
      $region85: #{tpu_custom_call.1} parent=5 // pred_check
        %p777 = pneg %p776
      $region86: #{tpu_custom_call.1} parent=5 // pred_check_branch
        %779 = sbr.rel (%p777) target = $region88
      $region87: #{tpu_custom_call.1} parent=5 // pred_region
        %s780 = ssub.s32 %s26, 2
        // Predicated region
        $region89: #{tpu_custom_call.1} parent=87 // pred_check
          %p781 = pneg %p275
        $region90: #{tpu_custom_call.1} parent=87 // pred_check_branch
          %783 = sbr.rel (%p781) target = $region92
        $region91: #{tpu_custom_call.1} parent=87 // pred_region
          %s784 = sand.u32 %s260, 1
          %s785 = scalar_lea.sflag [#allocation4], %s784
          %s786 = sand.u32 %s260, 1
          %s787 = smul.addr %s786, 4
          %s788 = scalar_lea.vmem [#allocation11], %s787
          %789 = dma.done %s785, 64
        $region92: #{tpu_custom_call.1} parent=87 // pred_fallthru
          _
      $region88: #{tpu_custom_call.1} parent=5 // pred_fallthru
        _
    $region6: #{tpu_custom_call.1} parent=1 // loop_footer
      %s30 = sadd.s32 1, %s26
    $region7: #{tpu_custom_call.1} parent=1 // loop_footer_branch
      %25 = sbr.rel target = $region3
    $region8: #{tpu_custom_call.1} parent=1 // loop_exit
      _
    %790 = vsyncpa [#allocation3], 1
    %s791 = scalar_lea.sflag [#allocation3], 1
    %792 = vsyncpa %s791, 1
    %793 = vsyncpa [#allocation6], 1
    %s794 = scalar_lea.sflag [#allocation6], 1
    %795 = vsyncpa %s794, 1
    %796 = vsyncpa [#allocation9], 1
    %797 = vsyncpa [#allocation4], 1
    %s798 = scalar_lea.sflag [#allocation4], 1
    %799 = vsyncpa %s798, 1

// kernel: tpu_custom_call.1
$region0: #{tpu_custom_call.1}
  #allocation0 [shape = 'u32[]', space=smem, size = 0x4, offset = 0x4, fixed_abs, tag = 'smem constant byte address 0x4 - core index']
  #allocation1 [shape = 'u32[144,128]{1,0:T(1,128)}', space=vmem, size = 0x12000, scoped, tag = 'internal scratch']
  %s0 = inlined_call_operand.hbm [shape: f32[16,16], index: 0, kind: input, shape index: {}]
  %s1 = inlined_call_operand.hbm [shape: f32[16,32], index: 1, kind: input, shape index: {}]
  %s2 = inlined_call_operand.hbm [shape: bf16[48,64], index: 2, kind: input, shape index: {}]
  %s3 = inlined_call_operand.vmem [shape: f32[1,64], index: 3, kind: input, shape index: {}]
  %s4 = inlined_call_operand.hbm [shape: bf16[48,64], index: 4, kind: input, shape index: {}]
  %s5 = inlined_call_operand.vmem [shape: f32[1,64], index: 5, kind: input, shape index: {}]
  %s6 = inlined_call_operand.vmem [shape: bf16[16,64], index: 6, kind: input, shape index: {}]
  %s7 = inlined_call_operand.vmem [shape: f32[1,64], index: 7, kind: input, shape index: {}]
  %s8 = inlined_call_operand.hbm [shape: bf16[32,64], index: 8, kind: input, shape index: {}]
  %s9 = inlined_call_operand.vmem [shape: f32[1,64], index: 9, kind: input, shape index: {}]
  %s10 = inlined_call_operand.hbm [shape: bf16[16,64], index: 10, kind: output, shape index: {}]
  %s11 = sld [smem:[#allocation0]]
  $region93: #{tpu_custom_call.1} parent=0
    _
  %s13 = ssub.s32 1, %s11
  %s14 = scalar_select 0, %s13, %s11
  $region1: #{tpu_custom_call.1} parent=0
    #allocation2 [shape = 'u8[8192]{0}', space=vmem, size = 0x2000, scoped, tag = 'input window, operand 0']
    #allocation3 [shape = 's32[2]{0}', space=sflag, size = 0x8, scoped, tag = 'scoped memory for tpu_custom_call.1']
    #allocation4 [shape = 's32[2]{0}', space=sflag, size = 0x8, scoped, tag = 'scoped memory for tpu_custom_call.1']
    #allocation5 [shape = 'u8[8192]{0}', space=vmem, size = 0x2000, scoped, tag = 'input window, operand 1']
    #allocation6 [shape = 's32[2]{0}', space=sflag, size = 0x8, scoped, tag = 'scoped memory for tpu_custom_call.1']
    #allocation7 [shape = 'u8[12288]{0}', space=vmem, size = 0x3000, scoped, tag = 'input window, operand 2, single buffered']
    #allocation8 [shape = 'u8[12288]{0}', space=vmem, size = 0x3000, scoped, tag = 'input window, operand 4, single buffered']
    #allocation9 [shape = 's32[1]{0}', space=sflag, size = 0x4, scoped, tag = 'scoped memory for tpu_custom_call.1']
    #allocation10 [shape = 'u8[8192]{0}', space=vmem, size = 0x2000, scoped, tag = 'input window, operand 8, single buffered']
    #allocation11 [shape = 'u8[4096]{0}', space=vmem, size = 0x1000, scoped, tag = 'output window, operand 0']
    %15 = vsyncpa [#allocation3], 0
    %s16 = scalar_lea.sflag [#allocation3], 1
    %17 = vsyncpa %s16, 0
    %18 = vsyncpa [#allocation6], 0
    %s19 = scalar_lea.sflag [#allocation6], 1
    %20 = vsyncpa %s19, 0
    %21 = vsyncpa [#allocation9], 0
    %22 = vsyncpa [#allocation4], 0
    %s23 = scalar_lea.sflag [#allocation4], 1
    %24 = vsyncpa %s23, 0
    loop: start=0, step=1, limit=4
    $region2: #{tpu_custom_call.1} parent=1 // loop_pre_header
      _
    $region3: #{tpu_custom_call.1} parent=1 // loop_header
      %s26 = sphi 0, %s30
      %p27 = scmp.ge.s32.totalorder %s26, 4
      %s36 = sphi 0, %s38
      %s39 = sphi 0, %s36
      %s40 = sphi 0, %s39
      %s56 = sphi 0, %s40
      %s62 = sphi 0, %s64
      %s65 = sphi 0, %s62
      %s66 = sphi 0, %s65
      %s82 = sphi 0, %s66
      %s86 = sphi 0, %s86
      %s88 = sphi 0, %s86
      %s89 = sphi 0, %s88
      %s103 = sphi 0, %s89
      %s107 = sphi 0, %s107
      %s109 = sphi 0, %s107
      %s110 = sphi 0, %s109
      %s124 = sphi 0, %s110
      %s128 = sphi 0, %s128
      %s130 = sphi 0, %s128
      %s131 = sphi 0, %s130
      %s145 = sphi 0, %s131
      %s149 = sphi 0, %s149
      %s151 = sphi 0, %s149
      %s152 = sphi 0, %s151
      %s166 = sphi 0, %s152
      %s170 = sphi 0, %s170
      %s172 = sphi 0, %s170
      %s173 = sphi 0, %s172
      %s187 = sphi 0, %s173
      %s191 = sphi 0, %s191
      %s193 = sphi 0, %s191
      %s194 = sphi 0, %s193
      %s208 = sphi 0, %s194
      %s212 = sphi 0, %s212
      %s214 = sphi 0, %s212
      %s215 = sphi 0, %s214
      %s229 = sphi 0, %s215
      %s233 = sphi 0, %s233
      %s235 = sphi 0, %s233
      %s236 = sphi 0, %s235
      %s250 = sphi 0, %s236
      %s256 = sphi 0, %s258
      %s259 = sphi 0, %s256
      %s260 = sphi 0, %s259
      %s276 = sphi 0, %s260
    $region4: #{tpu_custom_call.1} parent=1 // loop_header_branch
      %29 = sbr.rel (%p27) target = $region8
    $region5: #{tpu_custom_call.1} parent=1 // loop_body
      %s31 = ssub.s32 %s26, 1
      %s32 = ssub.s32 %s26, 2
      %s33 = sadd.s32 %s26, 1
      %s34 = ssub.s32 %s26, %s33
      %p35 = scmp.eq.s32.totalorder %s34, 0
      %s37 = sadd.s32 %s36, 1
      %s38 = scalar_select %p35, %s36, %s37
      %p41 = pneg %p35
      %p42 = scmp.eq.s32.totalorder %s26, 1
      %p43 = por %p41, %p42
      %p44 = scmp.ne.s32.totalorder %s36, %s39
      %p45 = scmp.eq.s32.totalorder %s26, 0
      %p46 = por %p44, %p45
      %p47 = scmp.ne.s32.totalorder %s36, %s39
      %p48 = scmp.eq.s32.totalorder %s31, 1
      %p49 = por %p47, %p48
      %p50 = scmp.ne.s32.totalorder %s39, %s40
      %p51 = scmp.eq.s32.totalorder %s31, 0
      %p52 = por %p50, %p51
      %p53 = scmp.ne.s32.totalorder %s39, %s40
      %p54 = scmp.eq.s32.totalorder %s32, 1
      %p55 = por %p53, %p54
      %p57 = scmp.ne.s32.totalorder %s40, %s56
      %p58 = scmp.eq.s32.totalorder %s32, 0
      %p59 = por %p57, %p58
      %s60 = ssub.s32 %s26, %s33
      %p61 = scmp.eq.s32.totalorder %s60, 0
      %s63 = sadd.s32 %s62, 1
      %s64 = scalar_select %p61, %s62, %s63
      %p67 = pneg %p61
      %p68 = scmp.eq.s32.totalorder %s26, 1
      %p69 = por %p67, %p68
      %p70 = scmp.ne.s32.totalorder %s62, %s65
      %p71 = scmp.eq.s32.totalorder %s26, 0
      %p72 = por %p70, %p71
      %p73 = scmp.ne.s32.totalorder %s62, %s65
      %p74 = scmp.eq.s32.totalorder %s31, 1
      %p75 = por %p73, %p74
      %p76 = scmp.ne.s32.totalorder %s65, %s66
      %p77 = scmp.eq.s32.totalorder %s31, 0
      %p78 = por %p76, %p77
      %p79 = scmp.ne.s32.totalorder %s65, %s66
      %p80 = scmp.eq.s32.totalorder %s32, 1
      %p81 = por %p79, %p80
      %p83 = scmp.ne.s32.totalorder %s66, %s82
      %p84 = scmp.eq.s32.totalorder %s32, 0
      %p85 = por %p83, %p84
      %s87 = sadd.s32 %s86, 1
      %p90 = scmp.eq.s32.totalorder %s26, 1
      %p91 = scmp.ne.s32.totalorder %s86, %s88
      %p92 = scmp.eq.s32.totalorder %s26, 0
      %p93 = por %p91, %p92
      %p94 = scmp.ne.s32.totalorder %s86, %s88
      %p95 = scmp.eq.s32.totalorder %s31, 1
      %p96 = por %p94, %p95
      %p97 = scmp.ne.s32.totalorder %s88, %s89
      %p98 = scmp.eq.s32.totalorder %s31, 0
      %p99 = por %p97, %p98
      %p100 = scmp.ne.s32.totalorder %s88, %s89
      %p101 = scmp.eq.s32.totalorder %s32, 1
      %p102 = por %p100, %p101
      %p104 = scmp.ne.s32.totalorder %s89, %s103
      %p105 = scmp.eq.s32.totalorder %s32, 0
      %p106 = por %p104, %p105
      %s108 = sadd.s32 %s107, 1
      %p111 = scmp.eq.s32.totalorder %s26, 1
      %p112 = scmp.ne.s32.totalorder %s107, %s109
      %p113 = scmp.eq.s32.totalorder %s26, 0
      %p114 = por %p112, %p113
      %p115 = scmp.ne.s32.totalorder %s107, %s109
      %p116 = scmp.eq.s32.totalorder %s31, 1
      %p117 = por %p115, %p116
      %p118 = scmp.ne.s32.totalorder %s109, %s110
      %p119 = scmp.eq.s32.totalorder %s31, 0
      %p120 = por %p118, %p119
      %p121 = scmp.ne.s32.totalorder %s109, %s110
      %p122 = scmp.eq.s32.totalorder %s32, 1
      %p123 = por %p121, %p122
      %p125 = scmp.ne.s32.totalorder %s110, %s124
      %p126 = scmp.eq.s32.totalorder %s32, 0
      %p127 = por %p125, %p126
      %s129 = sadd.s32 %s128, 1
      %p132 = scmp.eq.s32.totalorder %s26, 1
      %p133 = scmp.ne.s32.totalorder %s128, %s130
      %p134 = scmp.eq.s32.totalorder %s26, 0
      %p135 = por %p133, %p134
      %p136 = scmp.ne.s32.totalorder %s128, %s130
      %p137 = scmp.eq.s32.totalorder %s31, 1
      %p138 = por %p136, %p137
      %p139 = scmp.ne.s32.totalorder %s130, %s131
      %p140 = scmp.eq.s32.totalorder %s31, 0
      %p141 = por %p139, %p140
      %p142 = scmp.ne.s32.totalorder %s130, %s131
      %p143 = scmp.eq.s32.totalorder %s32, 1
      %p144 = por %p142, %p143
      %p146 = scmp.ne.s32.totalorder %s131, %s145
      %p147 = scmp.eq.s32.totalorder %s32, 0
      %p148 = por %p146, %p147
      %s150 = sadd.s32 %s149, 1
      %p153 = scmp.eq.s32.totalorder %s26, 1
      %p154 = scmp.ne.s32.totalorder %s149, %s151
      %p155 = scmp.eq.s32.totalorder %s26, 0
      %p156 = por %p154, %p155
      %p157 = scmp.ne.s32.totalorder %s149, %s151
      %p158 = scmp.eq.s32.totalorder %s31, 1
      %p159 = por %p157, %p158
      %p160 = scmp.ne.s32.totalorder %s151, %s152
      %p161 = scmp.eq.s32.totalorder %s31, 0
      %p162 = por %p160, %p161
      %p163 = scmp.ne.s32.totalorder %s151, %s152
      %p164 = scmp.eq.s32.totalorder %s32, 1
      %p165 = por %p163, %p164
      %p167 = scmp.ne.s32.totalorder %s152, %s166
      %p168 = scmp.eq.s32.totalorder %s32, 0
      %p169 = por %p167, %p168
      %s171 = sadd.s32 %s170, 1
      %p174 = scmp.eq.s32.totalorder %s26, 1
      %p175 = scmp.ne.s32.totalorder %s170, %s172
      %p176 = scmp.eq.s32.totalorder %s26, 0
      %p177 = por %p175, %p176
      %p178 = scmp.ne.s32.totalorder %s170, %s172
      %p179 = scmp.eq.s32.totalorder %s31, 1
      %p180 = por %p178, %p179
      %p181 = scmp.ne.s32.totalorder %s172, %s173
      %p182 = scmp.eq.s32.totalorder %s31, 0
      %p183 = por %p181, %p182
      %p184 = scmp.ne.s32.totalorder %s172, %s173
      %p185 = scmp.eq.s32.totalorder %s32, 1
      %p186 = por %p184, %p185
      %p188 = scmp.ne.s32.totalorder %s173, %s187
      %p189 = scmp.eq.s32.totalorder %s32, 0
      %p190 = por %p188, %p189
      %s192 = sadd.s32 %s191, 1
      %p195 = scmp.eq.s32.totalorder %s26, 1
      %p196 = scmp.ne.s32.totalorder %s191, %s193
      %p197 = scmp.eq.s32.totalorder %s26, 0
      %p198 = por %p196, %p197
      %p199 = scmp.ne.s32.totalorder %s191, %s193
      %p200 = scmp.eq.s32.totalorder %s31, 1
      %p201 = por %p199, %p200
      %p202 = scmp.ne.s32.totalorder %s193, %s194
      %p203 = scmp.eq.s32.totalorder %s31, 0
      %p204 = por %p202, %p203
      %p205 = scmp.ne.s32.totalorder %s193, %s194
      %p206 = scmp.eq.s32.totalorder %s32, 1
      %p207 = por %p205, %p206
      %p209 = scmp.ne.s32.totalorder %s194, %s208
      %p210 = scmp.eq.s32.totalorder %s32, 0
      %p211 = por %p209, %p210
      %s213 = sadd.s32 %s212, 1
      %p216 = scmp.eq.s32.totalorder %s26, 1
      %p217 = scmp.ne.s32.totalorder %s212, %s214
      %p218 = scmp.eq.s32.totalorder %s26, 0
      %p219 = por %p217, %p218
      %p220 = scmp.ne.s32.totalorder %s212, %s214
      %p221 = scmp.eq.s32.totalorder %s31, 1
      %p222 = por %p220, %p221
      %p223 = scmp.ne.s32.totalorder %s214, %s215
      %p224 = scmp.eq.s32.totalorder %s31, 0
      %p225 = por %p223, %p224
      %p226 = scmp.ne.s32.totalorder %s214, %s215
      %p227 = scmp.eq.s32.totalorder %s32, 1
      %p228 = por %p226, %p227
      %p230 = scmp.ne.s32.totalorder %s215, %s229
      %p231 = scmp.eq.s32.totalorder %s32, 0
      %p232 = por %p230, %p231
      %s234 = sadd.s32 %s233, 1
      %p237 = scmp.eq.s32.totalorder %s26, 1
      %p238 = scmp.ne.s32.totalorder %s233, %s235
      %p239 = scmp.eq.s32.totalorder %s26, 0
      %p240 = por %p238, %p239
      %p241 = scmp.ne.s32.totalorder %s233, %s235
      %p242 = scmp.eq.s32.totalorder %s31, 1
      %p243 = por %p241, %p242
      %p244 = scmp.ne.s32.totalorder %s235, %s236
      %p245 = scmp.eq.s32.totalorder %s31, 0
      %p246 = por %p244, %p245
      %p247 = scmp.ne.s32.totalorder %s235, %s236
      %p248 = scmp.eq.s32.totalorder %s32, 1
      %p249 = por %p247, %p248
      %p251 = scmp.ne.s32.totalorder %s236, %s250
      %p252 = scmp.eq.s32.totalorder %s32, 0
      %p253 = por %p251, %p252
      %s254 = ssub.s32 %s26, %s33
      %p255 = scmp.eq.s32.totalorder %s254, 0
      %s257 = sadd.s32 %s256, 1
      %s258 = scalar_select %p255, %s256, %s257
      %p261 = pneg %p255
      %p262 = scmp.eq.s32.totalorder %s26, 1
      %p263 = por %p261, %p262
      %p264 = scmp.ne.s32.totalorder %s256, %s259
      %p265 = scmp.eq.s32.totalorder %s26, 0
      %p266 = por %p264, %p265
      %p267 = scmp.ne.s32.totalorder %s256, %s259
      %p268 = scmp.eq.s32.totalorder %s31, 1
      %p269 = por %p267, %p268
      %p270 = scmp.ne.s32.totalorder %s259, %s260
      %p271 = scmp.eq.s32.totalorder %s31, 0
      %p272 = por %p270, %p271
      %p273 = scmp.ne.s32.totalorder %s259, %s260
      %p274 = scmp.eq.s32.totalorder %s32, 1
      %p275 = por %p273, %p274
      %p277 = scmp.ne.s32.totalorder %s260, %s276
      %p278 = scmp.eq.s32.totalorder %s32, 0
      %p279 = por %p277, %p278
      %p280 = scmp.le.s32.totalorder 1, %s26
      %p281 = scmp.lt.s32.totalorder %s26, 3
      %p282 = pnand %p280, %p281
      %p283 = pneg %p282
      // Predicated region
      $region9: #{tpu_custom_call.1} parent=5 // pred_check
        _
      $region10: #{tpu_custom_call.1} parent=5 // pred_check_branch
        %285 = sbr.rel (%p282) target = $region12
      $region11: #{tpu_custom_call.1} parent=5 // pred_region
        %s286 = ssub.s32 %s26, 1
        // Predicated region
        $region13: #{tpu_custom_call.1} parent=11 // pred_check
          %p287 = pneg %p99
        $region14: #{tpu_custom_call.1} parent=11 // pred_check_branch
          %289 = sbr.rel (%p287) target = $region16
        $region15: #{tpu_custom_call.1} parent=11 // pred_region
          %s291 = ssub.s32 384, 384
          %292 = vsyncadd [#allocation6], %s291
          %s293 = sshll.u32 [#allocation7], 4
          %s294 = int_to_ptr.vmem [resolvable:$true] %s293
          %299 = dma.hbm_to_vmem [thread:$0]  %s2, 384, %s294, [#allocation6], 64, 64, 4
        $region16: #{tpu_custom_call.1} parent=11 // pred_fallthru
          _
        // Predicated region
        $region17: #{tpu_custom_call.1} parent=11 // pred_check
          %p300 = pneg %p120
        $region18: #{tpu_custom_call.1} parent=11 // pred_check_branch
          %302 = sbr.rel (%p300) target = $region20
        $region19: #{tpu_custom_call.1} parent=11 // pred_region
          _
        $region20: #{tpu_custom_call.1} parent=11 // pred_fallthru
          _
        // Predicated region
        $region21: #{tpu_custom_call.1} parent=11 // pred_check
          %p303 = pneg %p141
        $region22: #{tpu_custom_call.1} parent=11 // pred_check_branch
          %305 = sbr.rel (%p303) target = $region24
        $region23: #{tpu_custom_call.1} parent=11 // pred_region
          %s307 = ssub.s32 384, 384
          %308 = vsyncadd [#allocation9], %s307
          %s309 = sshll.u32 [#allocation8], 4
          %s310 = int_to_ptr.vmem [resolvable:$true] %s309
          %315 = dma.hbm_to_vmem [thread:$0]  %s4, 384, %s310, [#allocation9], 64, 64, 4
        $region24: #{tpu_custom_call.1} parent=11 // pred_fallthru
          _
        // Predicated region
        $region25: #{tpu_custom_call.1} parent=11 // pred_check
          %p316 = pneg %p162
        $region26: #{tpu_custom_call.1} parent=11 // pred_check_branch
          %318 = sbr.rel (%p316) target = $region28
        $region27: #{tpu_custom_call.1} parent=11 // pred_region
          _
        $region28: #{tpu_custom_call.1} parent=11 // pred_fallthru
          _
        // Predicated region
        $region29: #{tpu_custom_call.1} parent=11 // pred_check
          %p319 = pneg %p183
        $region30: #{tpu_custom_call.1} parent=11 // pred_check_branch
          %321 = sbr.rel (%p319) target = $region32
        $region31: #{tpu_custom_call.1} parent=11 // pred_region
          _
        $region32: #{tpu_custom_call.1} parent=11 // pred_fallthru
          _
        // Predicated region
        $region33: #{tpu_custom_call.1} parent=11 // pred_check
          %p322 = pneg %p204
        $region34: #{tpu_custom_call.1} parent=11 // pred_check_branch
          %324 = sbr.rel (%p322) target = $region36
        $region35: #{tpu_custom_call.1} parent=11 // pred_region
          _
        $region36: #{tpu_custom_call.1} parent=11 // pred_fallthru
          _
        // Predicated region
        $region37: #{tpu_custom_call.1} parent=11 // pred_check
          %p325 = pneg %p225
        $region38: #{tpu_custom_call.1} parent=11 // pred_check_branch
          %327 = sbr.rel (%p325) target = $region40
        $region39: #{tpu_custom_call.1} parent=11 // pred_region
          %s329 = ssub.s32 256, 256
          %330 = vsyncadd [#allocation9], %s329
          %s331 = sshll.u32 [#allocation10], 4
          %s332 = int_to_ptr.vmem [resolvable:$true] %s331
          %337 = dma.hbm_to_vmem [thread:$0]  %s8, 256, %s332, [#allocation9], 64, 64, 4
        $region40: #{tpu_custom_call.1} parent=11 // pred_fallthru
          _
        // Predicated region
        $region41: #{tpu_custom_call.1} parent=11 // pred_check
          %p338 = pneg %p246
        $region42: #{tpu_custom_call.1} parent=11 // pred_check_branch
          %340 = sbr.rel (%p338) target = $region44
        $region43: #{tpu_custom_call.1} parent=11 // pred_region
          _
        $region44: #{tpu_custom_call.1} parent=11 // pred_fallthru
          _
      $region12: #{tpu_custom_call.1} parent=5 // pred_fallthru
        _
      %p341 = scmp.lt.s32.totalorder %s26, 2
      // Predicated region
      $region45: #{tpu_custom_call.1} parent=5 // pred_check
        %p342 = pneg %p341
      $region46: #{tpu_custom_call.1} parent=5 // pred_check_branch
        %344 = sbr.rel (%p342) target = $region48
      $region47: #{tpu_custom_call.1} parent=5 // pred_region
        // Predicated region
        $region49: #{tpu_custom_call.1} parent=47 // pred_check
          %p345 = pneg %p46
        $region50: #{tpu_custom_call.1} parent=47 // pred_check_branch
          %347 = sbr.rel (%p345) target = $region52
        $region51: #{tpu_custom_call.1} parent=47 // pred_region
          %s348 = sand.u32 %s36, 1
          %s349 = scalar_lea.sflag [#allocation3], %s348
          %s350 = sand.u32 %s36, 1
          %s351 = smul.addr %s350, 8
          %s352 = scalar_lea.vmem [#allocation2], %s351
          %s354 = ssub.s32 128, 128
          %355 = vsyncadd %s349, %s354
          %s356 = smul.addr %s26, 128
          %s357 = scalar_lea.hbm %s0, %s356
          %s359 = sshll.u32 %s352, 4
          %s360 = int_to_ptr.vmem [resolvable:$true] %s359
          %362 = dma.hbm_to_vmem [thread:$0]  %s357, 128, %s360, %s349
        $region52: #{tpu_custom_call.1} parent=47 // pred_fallthru
          _
        // Predicated region
        $region53: #{tpu_custom_call.1} parent=47 // pred_check
          %p363 = pneg %p72
        $region54: #{tpu_custom_call.1} parent=47 // pred_check_branch
          %365 = sbr.rel (%p363) target = $region56
        $region55: #{tpu_custom_call.1} parent=47 // pred_region
          %s366 = sand.u32 %s26, 1
          %s367 = scalar_lea.sflag [#allocation6], %s366
          %s368 = sand.u32 %s62, 1
          %s369 = smul.addr %s368, 8
          %s370 = scalar_lea.vmem [#allocation5], %s369
          %s372 = ssub.s32 128, 128
          %373 = vsyncadd %s367, %s372
          %s374 = smul.addr %s26, 128
          %s375 = scalar_lea.hbm %s1, %s374
          %s377 = sshll.u32 %s370, 4
          %s378 = int_to_ptr.vmem [resolvable:$true] %s377
          %380 = dma.hbm_to_vmem [thread:$0]  %s375, 128, %s378, %s367
        $region56: #{tpu_custom_call.1} parent=47 // pred_fallthru
          _
      $region48: #{tpu_custom_call.1} parent=5 // pred_fallthru
        _
      %p381 = scmp.le.s32.totalorder 1, %s26
      %p382 = scmp.lt.s32.totalorder %s26, 3
      %p383 = pnand %p381, %p382
      %p384 = pneg %p383
      // Predicated region
      $region57: #{tpu_custom_call.1} parent=5 // pred_check
        _
      $region58: #{tpu_custom_call.1} parent=5 // pred_check_branch
        %386 = sbr.rel (%p383) target = $region60
      $region59: #{tpu_custom_call.1} parent=5 // pred_region
        %s387 = ssub.s32 %s26, 1
        %s388 = sand.u32 %s39, 1
        %s389 = scalar_lea.sflag [#allocation3], %s388
        %s390 = sand.u32 %s39, 1
        %s391 = smul.addr %s390, 8
        %s392 = scalar_lea.vmem [#allocation2], %s391
        // Predicated region
        $region61: #{tpu_custom_call.1} parent=59 // pred_check
          %p393 = pneg %p52
        $region62: #{tpu_custom_call.1} parent=59 // pred_check_branch
          %395 = sbr.rel (%p393) target = $region64
        $region63: #{tpu_custom_call.1} parent=59 // pred_region
          %396 = dma.done %s389, 128
        $region64: #{tpu_custom_call.1} parent=59 // pred_fallthru
          _
        %s397 = sand.u32 %s31, 1
        %s398 = scalar_lea.sflag [#allocation6], %s397
        %s399 = sand.u32 %s65, 1
        %s400 = smul.addr %s399, 8
        %s401 = scalar_lea.vmem [#allocation5], %s400
        // Predicated region
        $region65: #{tpu_custom_call.1} parent=59 // pred_check
          %p402 = pneg %p78
        $region66: #{tpu_custom_call.1} parent=59 // pred_check_branch
          %404 = sbr.rel (%p402) target = $region68
        $region67: #{tpu_custom_call.1} parent=59 // pred_region
          %405 = dma.done %s398, 128
        $region68: #{tpu_custom_call.1} parent=59 // pred_fallthru
          _
        // Predicated region
        $region69: #{tpu_custom_call.1} parent=59 // pred_check
          %p406 = pneg %p99
        $region70: #{tpu_custom_call.1} parent=59 // pred_check_branch
          %408 = sbr.rel (%p406) target = $region72
        $region71: #{tpu_custom_call.1} parent=59 // pred_region
          %409 = dma.done [#allocation6], 384
        $region72: #{tpu_custom_call.1} parent=59 // pred_fallthru
          _
        // Predicated region
        $region73: #{tpu_custom_call.1} parent=59 // pred_check
          %p410 = pneg %p141
        $region74: #{tpu_custom_call.1} parent=59 // pred_check_branch
          %412 = sbr.rel (%p410) target = $region76
        $region75: #{tpu_custom_call.1} parent=59 // pred_region
          %413 = dma.done [#allocation9], 384
        $region76: #{tpu_custom_call.1} parent=59 // pred_fallthru
          _
        // Predicated region
        $region77: #{tpu_custom_call.1} parent=59 // pred_check
          %p414 = pneg %p225
        $region78: #{tpu_custom_call.1} parent=59 // pred_check_branch
          %416 = sbr.rel (%p414) target = $region80
        $region79: #{tpu_custom_call.1} parent=59 // pred_region
          %417 = dma.done [#allocation9], 256
        $region80: #{tpu_custom_call.1} parent=59 // pred_fallthru
          _
        %s418 = sand.u32 %s39, 1
        %s419 = scalar_lea.sflag [#allocation3], %s418
        %s420 = sand.u32 %s39, 1
        %s421 = smul.addr %s420, 8
        %s422 = scalar_lea.vmem [#allocation2], %s421
        %p423 = pneg %p52
        %p424 = pneg %p49
        %s425 = sand.u32 %s31, 1
        %s426 = scalar_lea.sflag [#allocation6], %s425
        %s427 = sand.u32 %s65, 1
        %s428 = smul.addr %s427, 8
        %s429 = scalar_lea.vmem [#allocation5], %s428
        %p430 = pneg %p78
        %p431 = pneg %p75
        %p432 = pneg %p99
        %p433 = pneg %p96
        %p434 = pneg %p120
        %p435 = pneg %p117
        %p436 = pneg %p141
        %p437 = pneg %p138
        %p438 = pneg %p162
        %p439 = pneg %p159
        %p440 = pneg %p183
        %p441 = pneg %p180
        %p442 = pneg %p204
        %p443 = pneg %p201
        %p444 = pneg %p225
        %p445 = pneg %p222
        %p446 = pneg %p246
        %p447 = pneg %p243
        %p448 = pneg %p272
        %p449 = pneg %p269
        %s450 = sand.u32 %s259, 1
        %s451 = scalar_lea.sflag [#allocation4], %s450
        %s452 = sand.u32 %s259, 1
        %s453 = smul.addr %s452, 4
        %s454 = scalar_lea.vmem [#allocation11], %s453
        %v456 = vld [vmem:[%s392] sm:$0xff]
        %v457 = vpack.c.bf16 %v456, %v456
        %v458 = vld [vmem:[%s401] sm:$0xff]
        %v459 = vpack.c.bf16 %v458, %v458
        %461 = vrot.lane.b32.xlu0 %v459, 16
        %v462 = vpop.permute.xlu0 %461
        %vm463 = vcmask 130048
        %v466 = vsel %vm463, %v457, %v462
        %v467 = vld [vmem:[#allocation7] sm:$0xf]
        %v468 = vld [vmem:[#allocation7 + $0x4] sm:$0xf]
        %v469 = vld [vmem:[#allocation7 + $0x8] sm:$0xf]
        %v470 = vld [vmem:[#allocation7 + $0xc] sm:$0xf]
        %v471 = vld [vmem:[#allocation7 + $0x10] sm:$0xf]
        %v472 = vld [vmem:[#allocation7 + $0x14] sm:$0xf]
        %v473 = vld [vmem:[%s3] sm:$0x1]
        %v475 = vlaneseq
        %v476 = vshrl.u32 %v475, 7
        %v477 = vsub.s32 0, %v476
        %v478 = vrot.slane %v473, %v477
        %v486 = vunpack.c.l.b16 %v467
        %v487 = vunpack.c.l.b16 %v468
        %v488 = vunpack.c.l.b16 %v469
        %v489 = vunpack.c.l.b16 %v470
        %v490 = vunpack.c.l.b16 %v471
        %v491 = vunpack.c.l.b16 %v472
        %v492 = vpack.c.b16 %v487, %v486
        %v493 = vpack.c.b16 %v489, %v488
        %v494 = vpack.c.b16 %v491, %v490
        %vm498 = vcmask 392192
        %v499 = vsel %vm498, %v466, 0
        %501 = vmatprep.subr.bf16.mxu0 0
        %502 = vmatpush1.bf16.msra.mxu0 0
        %503 = vmatprep.subr.bf16.mxu0 0
        %504 = vmatpush1.bf16.msra.mxu0 0
        %505 = vmatprep.subr.bf16.mxu0 0
        %506 = vmatpush1.bf16.msra.mxu0 0
        %507 = vmatprep.subr.bf16.mxu0 0
        %508 = vmatpush1.bf16.msra.mxu0 0
        %509 = vmatprep.subr.bf16.mxu0 0
        %510 = vmatpush1.bf16.msra.mxu0 0
        %511 = vmatprep.subr.bf16.mxu0 0
        %512 = vmatpush1.bf16.msra.mxu0 %v494
        %513 = vmatprep.subr.bf16.mxu0 0
        %514 = vmatpush1.bf16.msra.mxu0 %v493
        %515 = vmatprep.subr.bf16.mxu0 0
        %516 = vmatpush1.bf16.msra.mxu0 %v492
        %517 = vmatprep.subr.bf16.mxu0 0
        %518 = vmatpush2.bf16.msra.mxu0 0
        %519 = vmatprep.subr.bf16.mxu0 0
        %520 = vmatpush2.bf16.msra.mxu0 0
        %521 = vmatprep.subr.bf16.mxu0 0
        %522 = vmatpush2.bf16.msra.mxu0 0
        %523 = vmatprep.subr.bf16.mxu0 0
        %524 = vmatpush2.bf16.msra.mxu0 0
        %525 = vmatprep.subr.bf16.mxu0 0
        %526 = vmatpush2.bf16.msra.mxu0 0
        %527 = vmatprep.subr.bf16.mxu0 0
        %528 = vmatpush2.bf16.msra.mxu0 0
        %529 = vmatprep.subr.bf16.mxu0 0
        %530 = vmatpush2.bf16.msra.mxu0 0
        %531 = vmatprep.subr.bf16.mxu0 0
        %532 = vmatpush2.bf16.msra.mxu0 0
        %533 = vmatprep.mubr.bf16.mxu0 0
        %534 = vmatmul.mubr.bf16.gmra.mxu0 %v499
        %v535 = vpop.f32.mrf.mxu0
        %v536 = vadd.f32 %v478, %v535
        %v537 = vpop.f32.mrf.mxu0
        %v538 = vpop.f32.mrf.mxu0
        %v539 = vpop.f32.mrf.mxu0
        %540 = vdwg.mxu0
        %v541 = vld [vmem:[#allocation8] sm:$0xf]
        %v542 = vld [vmem:[#allocation8 + $0x4] sm:$0xf]
        %v543 = vld [vmem:[#allocation8 + $0x8] sm:$0xf]
        %v544 = vld [vmem:[#allocation8 + $0xc] sm:$0xf]
        %v545 = vld [vmem:[#allocation8 + $0x10] sm:$0xf]
        %v546 = vld [vmem:[#allocation8 + $0x14] sm:$0xf]
        %v547 = vld [vmem:[%s5] sm:$0x1]
        %v549 = vlaneseq
        %v550 = vshrl.u32 %v549, 7
        %v551 = vsub.s32 0, %v550
        %v552 = vrot.slane %v547, %v551
        %v560 = vunpack.c.l.b16 %v541
        %v561 = vunpack.c.l.b16 %v542
        %v562 = vunpack.c.l.b16 %v543
        %v563 = vunpack.c.l.b16 %v544
        %v564 = vunpack.c.l.b16 %v545
        %v565 = vunpack.c.l.b16 %v546
        %v566 = vpack.c.b16 %v561, %v560
        %v567 = vpack.c.b16 %v563, %v562
        %v568 = vpack.c.b16 %v565, %v564
        %572 = vmatprep.subr.bf16.mxu0 0
        %573 = vmatpush1.bf16.msra.mxu0 0
        %574 = vmatprep.subr.bf16.mxu0 0
        %575 = vmatpush1.bf16.msra.mxu0 0
        %576 = vmatprep.subr.bf16.mxu0 0
        %577 = vmatpush1.bf16.msra.mxu0 0
        %578 = vmatprep.subr.bf16.mxu0 0
        %579 = vmatpush1.bf16.msra.mxu0 0
        %580 = vmatprep.subr.bf16.mxu0 0
        %581 = vmatpush1.bf16.msra.mxu0 0
        %582 = vmatprep.subr.bf16.mxu0 0
        %583 = vmatpush1.bf16.msra.mxu0 %v568
        %584 = vmatprep.subr.bf16.mxu0 0
        %585 = vmatpush1.bf16.msra.mxu0 %v567
        %586 = vmatprep.subr.bf16.mxu0 0
        %587 = vmatpush1.bf16.msra.mxu0 %v566
        %588 = vmatprep.subr.bf16.mxu0 0
        %589 = vmatpush2.bf16.msra.mxu0 0
        %590 = vmatprep.subr.bf16.mxu0 0
        %591 = vmatpush2.bf16.msra.mxu0 0
        %592 = vmatprep.subr.bf16.mxu0 0
        %593 = vmatpush2.bf16.msra.mxu0 0
        %594 = vmatprep.subr.bf16.mxu0 0
        %595 = vmatpush2.bf16.msra.mxu0 0
        %596 = vmatprep.subr.bf16.mxu0 0
        %597 = vmatpush2.bf16.msra.mxu0 0
        %598 = vmatprep.subr.bf16.mxu0 0
        %599 = vmatpush2.bf16.msra.mxu0 0
        %600 = vmatprep.subr.bf16.mxu0 0
        %601 = vmatpush2.bf16.msra.mxu0 0
        %602 = vmatprep.subr.bf16.mxu0 0
        %603 = vmatpush2.bf16.msra.mxu0 0
        %604 = vmatprep.mubr.bf16.mxu0 0
        %605 = vmatmul.mubr.bf16.gmra.mxu0 %v499
        %v606 = vpop.f32.mrf.mxu0
        %v607 = vadd.f32 %v552, %v606
        %v608 = vpop.f32.mrf.mxu0
        %v609 = vpop.f32.mrf.mxu0
        %v610 = vpop.f32.mrf.mxu0
        %611 = vdwg.mxu0
        %v612 = vld [vmem:[%s6] sm:$0xf]
        %v613 = vld [vmem:[%s6 + $0x4] sm:$0xf]
        %v614 = vld [vmem:[%s7] sm:$0x1]
        %v616 = vlaneseq
        %v617 = vshrl.u32 %v616, 7
        %v618 = vsub.s32 0, %v617
        %v619 = vrot.slane %v614, %v618
        %v623 = vunpack.c.l.b16 %v612
        %v624 = vunpack.c.l.b16 %v613
        %v625 = vpack.c.b16 %v624, %v623
        %v627 = vsel %vm463, %v457, 0
        %629 = vmatprep.subr.bf16.mxu0 0
        %630 = vmatpush1.bf16.msra.mxu0 0
        %631 = vmatprep.subr.bf16.mxu0 0
        %632 = vmatpush1.bf16.msra.mxu0 0
        %633 = vmatprep.subr.bf16.mxu0 0
        %634 = vmatpush1.bf16.msra.mxu0 0
        %635 = vmatprep.subr.bf16.mxu0 0
        %636 = vmatpush1.bf16.msra.mxu0 0
        %637 = vmatprep.subr.bf16.mxu0 0
        %638 = vmatpush1.bf16.msra.mxu0 0
        %639 = vmatprep.subr.bf16.mxu0 0
        %640 = vmatpush1.bf16.msra.mxu0 0
        %641 = vmatprep.subr.bf16.mxu0 0
        %642 = vmatpush1.bf16.msra.mxu0 0
        %643 = vmatprep.subr.bf16.mxu0 0
        %644 = vmatpush1.bf16.msra.mxu0 %v625
        %645 = vmatprep.subr.bf16.mxu0 0
        %646 = vmatpush2.bf16.msra.mxu0 0
        %647 = vmatprep.subr.bf16.mxu0 0
        %648 = vmatpush2.bf16.msra.mxu0 0
        %649 = vmatprep.subr.bf16.mxu0 0
        %650 = vmatpush2.bf16.msra.mxu0 0
        %651 = vmatprep.subr.bf16.mxu0 0
        %652 = vmatpush2.bf16.msra.mxu0 0
        %653 = vmatprep.subr.bf16.mxu0 0
        %654 = vmatpush2.bf16.msra.mxu0 0
        %655 = vmatprep.subr.bf16.mxu0 0
        %656 = vmatpush2.bf16.msra.mxu0 0
        %657 = vmatprep.subr.bf16.mxu0 0
        %658 = vmatpush2.bf16.msra.mxu0 0
        %659 = vmatprep.subr.bf16.mxu0 0
        %660 = vmatpush2.bf16.msra.mxu0 0
        %661 = vmatprep.mubr.bf16.mxu0 0
        %662 = vmatmul.mubr.bf16.gmra.mxu0 %v627
        %v663 = vpop.f32.mrf.mxu0
        %v664 = vadd.f32 %v619, %v663
        %v665 = vpop.f32.mrf.mxu0
        %v666 = vpop.f32.mrf.mxu0
        %v667 = vpop.f32.mrf.mxu0
        %668 = vdwg.mxu0
        %v669 = vld [vmem:[#allocation10] sm:$0xf]
        %v670 = vld [vmem:[#allocation10 + $0x4] sm:$0xf]
        %v671 = vld [vmem:[#allocation10 + $0x8] sm:$0xf]
        %v672 = vld [vmem:[#allocation10 + $0xc] sm:$0xf]
        %v673 = vld [vmem:[%s9] sm:$0x1]
        %v675 = vlaneseq
        %v676 = vshrl.u32 %v675, 7
        %v677 = vsub.s32 0, %v676
        %v678 = vrot.slane %v673, %v677
        %v684 = vunpack.c.l.b16 %v669
        %v685 = vunpack.c.l.b16 %v670
        %v686 = vunpack.c.l.b16 %v671
        %v687 = vunpack.c.l.b16 %v672
        %v688 = vpack.c.b16 %v685, %v684
        %v689 = vpack.c.b16 %v687, %v686
        %vm692 = vcmask 261120
        %v694 = vsel %vm692, %v459, 0
        %696 = vmatprep.subr.bf16.mxu0 0
        %697 = vmatpush1.bf16.msra.mxu0 0
        %698 = vmatprep.subr.bf16.mxu0 0
        %699 = vmatpush1.bf16.msra.mxu0 0
        %700 = vmatprep.subr.bf16.mxu0 0
        %701 = vmatpush1.bf16.msra.mxu0 0
        %702 = vmatprep.subr.bf16.mxu0 0
        %703 = vmatpush1.bf16.msra.mxu0 0
        %704 = vmatprep.subr.bf16.mxu0 0
        %705 = vmatpush1.bf16.msra.mxu0 0
        %706 = vmatprep.subr.bf16.mxu0 0
        %707 = vmatpush1.bf16.msra.mxu0 0
        %708 = vmatprep.subr.bf16.mxu0 0
        %709 = vmatpush1.bf16.msra.mxu0 %v689
        %710 = vmatprep.subr.bf16.mxu0 0
        %711 = vmatpush1.bf16.msra.mxu0 %v688
        %712 = vmatprep.subr.bf16.mxu0 0
        %713 = vmatpush2.bf16.msra.mxu0 0
        %714 = vmatprep.subr.bf16.mxu0 0
        %715 = vmatpush2.bf16.msra.mxu0 0
        %716 = vmatprep.subr.bf16.mxu0 0
        %717 = vmatpush2.bf16.msra.mxu0 0
        %718 = vmatprep.subr.bf16.mxu0 0
        %719 = vmatpush2.bf16.msra.mxu0 0
        %720 = vmatprep.subr.bf16.mxu0 0
        %721 = vmatpush2.bf16.msra.mxu0 0
        %722 = vmatprep.subr.bf16.mxu0 0
        %723 = vmatpush2.bf16.msra.mxu0 0
        %724 = vmatprep.subr.bf16.mxu0 0
        %725 = vmatpush2.bf16.msra.mxu0 0
        %726 = vmatprep.subr.bf16.mxu0 0
        %727 = vmatpush2.bf16.msra.mxu0 0
        %728 = vmatprep.mubr.bf16.mxu0 0
        %729 = vmatmul.mubr.bf16.gmra.mxu0 %v694
        %v730 = vpop.f32.mrf.mxu0
        %v731 = vadd.f32 %v678, %v730
        %v732 = vpop.f32.mrf.mxu0
        %v733 = vpop.f32.mrf.mxu0
        %v734 = vpop.f32.mrf.mxu0
        %735 = vdwg.mxu0
        %v736 = vmul.f32 %v536, 0.5
        %v737 = vtanh.pop %v736
        %v738 = vmul.f32 %v737, 0.5
        %v739 = vadd.f32 %v738, 0.5
        %v740 = vmul.f32 %v607, 0.5
        %v741 = vtanh.pop %v740
        %v742 = vmul.f32 %v741, 0.5
        %v743 = vadd.f32 %v742, 0.5
        %v744 = vmul.f32 %v739, %v731
        %v745 = vadd.f32 %v664, %v744
        %v746 = vtanh.pop %v745
        %748 = vrot.lane.b32.xlu0 %v458, 32
        %v749 = vpop.permute.xlu0 %748
        %v751 = vsel %vm692, %v458, %v749
        %v752 = vsub.f32 %v751, %v746
        %v753 = vmul.f32 %v743, %v752
        %v754 = vadd.f32 %v746, %v753
        %v755 = vpack.c.bf16 %v754, %v754
        %vm756 = vcmask 519168
        %757 = vst.msk [vmem:[%s454] sm:$0xf] %vm756, %v755
        %s758 = sand.u32 %s259, 1
        %s759 = scalar_lea.sflag [#allocation4], %s758
        %s760 = sand.u32 %s259, 1
        %s761 = smul.addr %s760, 4
        %s762 = scalar_lea.vmem [#allocation11], %s761
        // Predicated region
        $region81: #{tpu_custom_call.1} parent=59 // pred_check
          %p763 = pneg %p269
        $region82: #{tpu_custom_call.1} parent=59 // pred_check_branch
          %765 = sbr.rel (%p763) target = $region84
        $region83: #{tpu_custom_call.1} parent=59 // pred_region
          %s767 = ssub.s32 64, 64
          %768 = vsyncadd %s759, %s767
          %s769 = smul.addr %s31, 64
          %s770 = scalar_lea.hbm %s10, %s769
          %s772 = sshll.u32 %s762, 4
          %s773 = int_to_ptr.vmem [resolvable:$true] %s772
          %775 = dma.vmem_to_hbm [thread:$0]  %s773, 64, %s770, %s759
        $region84: #{tpu_custom_call.1} parent=59 // pred_fallthru
          _
      $region60: #{tpu_custom_call.1} parent=5 // pred_fallthru
        _
      %p776 = scmp.le.s32.totalorder 2, %s26
      // Predicated region
      $region85: #{tpu_custom_call.1} parent=5 // pred_check
        %p777 = pneg %p776
      $region86: #{tpu_custom_call.1} parent=5 // pred_check_branch
        %779 = sbr.rel (%p777) target = $region88
      $region87: #{tpu_custom_call.1} parent=5 // pred_region
        %s780 = ssub.s32 %s26, 2
        // Predicated region
        $region89: #{tpu_custom_call.1} parent=87 // pred_check
          %p781 = pneg %p275
        $region90: #{tpu_custom_call.1} parent=87 // pred_check_branch
          %783 = sbr.rel (%p781) target = $region92
        $region91: #{tpu_custom_call.1} parent=87 // pred_region
          %s784 = sand.u32 %s260, 1
          %s785 = scalar_lea.sflag [#allocation4], %s784
          %s786 = sand.u32 %s260, 1
          %s787 = smul.addr %s786, 4
          %s788 = scalar_lea.vmem [#allocation11], %s787
          %789 = dma.done %s785, 64
        $region92: #{tpu_custom_call.1} parent=87 // pred_fallthru
          _
      $region88: #{tpu_custom_call.1} parent=5 // pred_fallthru
        _
    $region6: #{tpu_custom_call.1} parent=1 // loop_footer
      %s30 = sadd.s32 1, %s26
    $region7: #{tpu_custom_call.1} parent=1 // loop_footer_branch
      %25 = sbr.rel target = $region3
    $region8: #{tpu_custom_call.1} parent=1 // loop_exit
      _
    %790 = vsyncpa [#allocation3], 1
    %s791 = scalar_lea.sflag [#allocation3], 1
    %792 = vsyncpa %s791, 1
    %793 = vsyncpa [#allocation6], 1
    %s794 = scalar_lea.sflag [#allocation6], 1
    %795 = vsyncpa %s794, 1
    %796 = vsyncpa [#allocation9], 1
    %797 = vsyncpa [#allocation4], 1
    %s798 = scalar_lea.sflag [#allocation4], 1
    %799 = vsyncpa %s798, 1

</llo_original>
